<compile_context>
chip_gen: v5e
topology: v5e:2x2
jax: 0.10.0
libtpu: 0.0.40
codegen_flags: <defaults>
</compile_context>

<pallas_src>
import functools

import jax
import jax.numpy as jnp
from jax.experimental import pallas as pl
from jax.experimental.pallas import tpu as pltpu

# ---------------- model hyper-parameters (small, consistent with the module) -----------------
BATCH = 2
SEQ = 16
HIDDEN = 32              # stands in for self.hidden_size (768 in the real module)
NUM_HEADS = 2
HEAD_DIM = HIDDEN // NUM_HEADS
PROMPT_LEN = 4           # plmconfig.prompt_len
NUM_TASKS = 4            # rows of task_specific_prompt_emb
BOTTLENECK = 16          # AE bottleneck
FFN = 4 * HIDDEN
MAX_POS = 64
VOCAB = 30592            # BERT vocab (30522) padded up to a multiple of 128
NUM_VERB = 11
SCORE_PAD = 128          # lane-dense verbalizer head width (11 real + zero padding)
LN_EPS = 1e-12

# packed small-vector table: one [NUM_VEC_ROWS, VEC_W] array, one DMA
VEC_W = max(128, FFN, 3 * HIDDEN, SCORE_PAD)
ROW_LN0_G, ROW_LN0_B = 0, 1
ROW_LN1_G, ROW_LN1_B = 2, 3
ROW_LN2_G, ROW_LN2_B = 4, 5
ROW_BQKV = 6
ROW_BO = 7
ROW_BF1 = 8
ROW_BF2 = 9
ROW_SB = 10
ROW_AE_EB = 11
ROW_AE_DB = 12
ROW_POS0 = 13
ROW_MASK0 = ROW_POS0 + PROMPT_LEN
NUM_VEC_ROWS = ROW_MASK0 + BATCH

# Bert verbalizer token ids used by the forward() score gather
BERT_SCORE_IDS = jnp.array(
    [2053, 2748, 6270, 8699, 2995, 4997, 8777, 3893, 4736, 2659, 2152],
    dtype=jnp.int32)


# ------------------------------- BlockSpec helpers --------------------------------------------
def _zeros_index_map(*_, ndim):
    return (0,) * ndim


def _full_specs(args):
    """Whole-array VMEM blocks (grid=(1,)): block_shape == full array shape for every input."""
    return [pl.BlockSpec(a.shape, functools.partial(_zeros_index_map, ndim=a.ndim))
            for a in args]


_SINGLE_STEP = pltpu.CompilerParams(dimension_semantics=("arbitrary",))


# ---------------------------------- fused Pallas kernel ---------------------------------------
def _fused_forward_kernel(x_ref, tsp_ref, vecs_ref,
                          ae_ew_ref, ae_dw_ref,
                          wqkv_ref, wo_ref, wf1_ref, wf2_ref, sw_ref,
                          o_ref):
    """AE(prompt) + prompt replacement + LN0 + MHA + LN1 + FFN + LN2 + verbalizer head.

    Everything stays in VMEM/vregs; the only HBM writeback is the [B*S, 128] padded score block.
    """
    f32 = jnp.float32
    H = HIDDEN

    def vec(row, width):
        return vecs_ref[row:row + 1, 0:width]                               # [1, width]

    def ln(v, g_row, b_row):
        g = vec(g_row, H)
        b = vec(b_row, H)
        mu = jnp.mean(v, axis=-1, keepdims=True)
        var = jnp.mean(jnp.square(v - mu), axis=-1, keepdims=True)
        return (v - mu) * jax.lax.rsqrt(var + LN_EPS) * g + b

    # ---- model_AE on the selected task prompts (bottleneck never leaves vregs) ----
    t = tsp_ref[...].astype(f32)                                            # [B*P, H]
    hb = jnp.dot(t, ae_ew_ref[...], preferred_element_type=f32) + vec(ROW_AE_EB, BOTTLENECK)
    hb = jnp.maximum(hb, 0.0)
    prompt = jnp.dot(hb, ae_dw_ref[...], preferred_element_type=f32) + vec(ROW_AE_DB, H)

    pos_p = vecs_ref[ROW_POS0:ROW_POS0 + PROMPT_LEN, 0:H]                   # [P, H]

    # ---- 'replace_task_specific_prompt_emb': first P token rows of each batch <- prompt + pos ----
    x = x_ref[...].astype(f32)                                              # [B*S, H] = word + pos
    parts = []
    for b in range(BATCH):
        pb = prompt[b * PROMPT_LEN:(b + 1) * PROMPT_LEN, :] + pos_p         # [P, H]
        rest = x[b * SEQ + PROMPT_LEN:(b + 1) * SEQ, :]                     # [S-P, H]
        parts.append(jnp.concatenate([pb, rest], axis=0))                   # [S, H]
    x = jnp.concatenate(parts, axis=0)                                      # [B*S, H]

    # ---- embeddings LayerNorm ----
    x0 = ln(x, ROW_LN0_G, ROW_LN0_B)

    # ---- fused QKV projection: one MXU call for the whole block ----
    qkv = jnp.dot(x0, wqkv_ref[...], preferred_element_type=f32) + vec(ROW_BQKV, 3 * H)  # [B*S, 3H]

    scale = 1.0 / float(HEAD_DIM) ** 0.5
    attn_parts = []
    for b in range(BATCH):
        r0 = b * SEQ
        neg = (1.0 - vecs_ref[ROW_MASK0 + b:ROW_MASK0 + b + 1, 0:SEQ]) * jnp.float32(-1e9)
        heads = []
        for h in range(NUM_HEADS):
            c = h * HEAD_DIM
            q = qkv[r0:r0 + SEQ, c:c + HEAD_DIM]                            # [S, Dh]
            k = qkv[r0:r0 + SEQ, H + c:H + c + HEAD_DIM]
            v = qkv[r0:r0 + SEQ, 2 * H + c:2 * H + c + HEAD_DIM]
            s = jnp.dot(q, k.T, preferred_element_type=f32) * scale + neg   # [S, S]
            s = s - jnp.max(s, axis=-1, keepdims=True)
            p = jnp.exp(s)
            p = p * pl.reciprocal(jnp.sum(p, axis=-1, keepdims=True), approx=True)
            heads.append(jnp.dot(p, v, preferred_element_type=f32))         # [S, Dh]
        attn_parts.append(jnp.concatenate(heads, axis=1))                   # [S, H]
    attn_cat = jnp.concatenate(attn_parts, axis=0)                          # [B*S, H]

    # ---- output projection (one matmul, equivalent to sum of per-head slices) + residual/LN ----
    attn_out = jnp.dot(attn_cat, wo_ref[...], preferred_element_type=f32) + vec(ROW_BO, H)
    x1 = ln(x0 + attn_out, ROW_LN1_G, ROW_LN1_B)

    # ---- FFN on the full block ----
    hmid = jnp.dot(x1, wf1_ref[...], preferred_element_type=f32) + vec(ROW_BF1, FFN)
    hmid = jax.nn.gelu(hmid)
    ffn = jnp.dot(hmid, wf2_ref[...], preferred_element_type=f32) + vec(ROW_BF2, H)
    x2 = ln(x1 + ffn, ROW_LN2_G, ROW_LN2_B)

    # ---- verbalizer-restricted LM head, padded to 128 lanes (unmasked stores) ----
    scores = jnp.dot(x2, sw_ref[...], preferred_element_type=f32) + vec(ROW_SB, SCORE_PAD)
    o_ref[...] = scores.astype(o_ref.dtype)


def fused_forward(x2d, tsp2d, vecs, ae_ew, ae_dw, wqkv, wo, wf1, wf2, sw_pad):
    args = (x2d, tsp2d, vecs, ae_ew, ae_dw, wqkv, wo, wf1, wf2, sw_pad)
    return pl.pallas_call(
        _fused_forward_kernel,
        out_shape=jax.ShapeDtypeStruct((BATCH * SEQ, SCORE_PAD), jnp.float32),
        grid=(1,),
        in_specs=_full_specs(args),
        out_specs=pl.BlockSpec((BATCH * SEQ, SCORE_PAD),
                               functools.partial(_zeros_index_map, ndim=2)),
        compiler_params=_SINGLE_STEP,
    )(*args)


# ---------------------------------- model glue -------------------------------------------------
def init_params(key):
    def nrm(k, shape):
        return 0.02 * jax.random.normal(k, shape, dtype=jnp.float32)
    ks = jax.random.split(key, 16)
    p = {
        # nn.Embedding(prompt_num, hidden_size)-style task prompt table (std=0.02 init)
        "task_prompt_table": nrm(ks[0], (NUM_TASKS, PROMPT_LEN, HIDDEN)),
        # model_AE (encoder/decoder linears)
        "ae_enc_w": nrm(ks[1], (HIDDEN, BOTTLENECK)), "ae_enc_b": jnp.zeros((BOTTLENECK,), jnp.float32),
        "ae_dec_w": nrm(ks[2], (BOTTLENECK, HIDDEN)), "ae_dec_b": jnp.zeros((HIDDEN,), jnp.float32),
        # synthetic BERT-style MLM encoder
        "word_emb": nrm(ks[3], (VOCAB, HIDDEN)),
        "pos_emb": nrm(ks[4], (MAX_POS, HIDDEN)),
        "ln0_g": jnp.ones((HIDDEN,), jnp.float32), "ln0_b": jnp.zeros((HIDDEN,), jnp.float32),
        "wq": nrm(ks[5], (HIDDEN, HIDDEN)), "bq": jnp.zeros((HIDDEN,), jnp.float32),
        "wk": nrm(ks[6], (HIDDEN, HIDDEN)), "bk": jnp.zeros((HIDDEN,), jnp.float32),
        "wv": nrm(ks[7], (HIDDEN, HIDDEN)), "bv": jnp.zeros((HIDDEN,), jnp.float32),
        "wo": nrm(ks[8], (HIDDEN, HIDDEN)), "bo": jnp.zeros((HIDDEN,), jnp.float32),
        "ln1_g": jnp.ones((HIDDEN,), jnp.float32), "ln1_b": jnp.zeros((HIDDEN,), jnp.float32),
        "w_ffn1": nrm(ks[9], (HIDDEN, FFN)), "b_ffn1": jnp.zeros((FFN,), jnp.float32),
        "w_ffn2": nrm(ks[10], (FFN, HIDDEN)), "b_ffn2": jnp.zeros((HIDDEN,), jnp.float32),
        "ln2_g": jnp.ones((HIDDEN,), jnp.float32), "ln2_b": jnp.zeros((HIDDEN,), jnp.float32),
        # LM head to vocab (stored [VOCAB, H]; only 11 verbalizer rows are ever streamed)
        "lm_w": nrm(ks[11], (VOCAB, HIDDEN)), "lm_b": jnp.zeros((VOCAB,), jnp.float32),
    }
    return p


def cross_prompt_forward(params, inputx, mask, task_name, label):
    """Mirrors crossPrompt.forward(..., prompt_emb_output='replace_task_specific_prompt_emb')."""
    # torch.index_select(self.task_specific_prompt_emb, 0, data['task_name'])
    tsp = jnp.take(params["task_prompt_table"], task_name, axis=0)          # [B, P, H]
    tsp2d = tsp.reshape(BATCH * PROMPT_LEN, HIDDEN)

    # word gather + positions (XLA glue: the 30592-row gather has no tidy BlockSpec form here).
    # The first PROMPT_LEN rows per batch are overwritten with AE(prompt)+pos inside the kernel.
    x = jnp.take(params["word_emb"], inputx, axis=0) + params["pos_emb"][None, :SEQ, :]
    x2d = x.reshape(BATCH * SEQ, HIDDEN)

    # Only the 11 BERT verbalizer vocab entries are ever consumed downstream: restrict the LM head
    # to them and pad to 128 lanes (lane-dense output) instead of materializing [B, S, VOCAB].
    sw = jnp.take(params["lm_w"], BERT_SCORE_IDS, axis=0).T                 # [H, 11]
    sw_pad = jnp.pad(sw, ((0, 0), (0, SCORE_PAD - NUM_VERB)))               # [H, 128]
    sb = jnp.take(params["lm_b"], BERT_SCORE_IDS)                           # [11]

    # fused QKV weight / bias
    wqkv = jnp.concatenate([params["wq"], params["wk"], params["wv"]], axis=1)   # [H, 3H]
    bqkv = jnp.concatenate([params["bq"], params["bk"], params["bv"]])           # [3H]

    # pack every small bias / LN / pos / mask vector into one [NUM_VEC_ROWS, 128] table (1 DMA)
    def pad_row(v):
        v = jnp.asarray(v, jnp.float32).reshape(-1)
        return jnp.pad(v, (0, VEC_W - v.shape[0]))

    rows = [
        params["ln0_g"], params["ln0_b"],
        params["ln1_g"], params["ln1_b"],
        params["ln2_g"], params["ln2_b"],
        bqkv, params["bo"], params["b_ffn1"], params["b_ffn2"], sb,
        params["ae_enc_b"], params["ae_dec_b"],
    ] + [params["pos_emb"][i] for i in range(PROMPT_LEN)] \
      + [mask.astype(jnp.float32)[b] for b in range(BATCH)]
    vecs = jnp.stack([pad_row(r) for r in rows])                            # [19, 128]

    scores_all = fused_forward(x2d, tsp2d, vecs,
                               params["ae_enc_w"], params["ae_dec_w"],
                               wqkv, params["wo"],
                               params["w_ffn1"], params["w_ffn2"], sw_pad)  # [B*S, 128]
    # mask_logits = logits[:, 0]; gather of the 11 verbalizer columns
    score = scores_all.reshape(BATCH, SEQ, SCORE_PAD)[:, 0, :NUM_VERB]      # [B, 11]

    # nn.CrossEntropyLoss()
    logp = jax.nn.log_softmax(score, axis=-1)
    loss = -jnp.mean(jnp.take_along_axis(logp, label[:, None], axis=1))
    return loss, score


def acc(score, label, acc_result):
    if acc_result is None:
        acc_result = {"total": 0, "right": 0}
    predict = jnp.argmax(score, axis=1)
    acc_result["total"] += int(label.shape[0])
    acc_result["right"] += int(jnp.sum((predict == label).astype(jnp.int32)))
    return acc_result


# ------------------------------------------ main -----------------------------------------------
if __name__ == "__main__":
    key = jax.random.PRNGKey(0)
    k_par, k_in, k_task, k_lab = jax.random.split(key, 4)
    params = init_params(k_par)

    inputx = jax.random.randint(k_in, (BATCH, SEQ), 0, 30522, dtype=jnp.int32)
    mask = jnp.ones((BATCH, SEQ), dtype=jnp.float32).at[1, SEQ - 3:].set(0.0)
    task_name = jax.random.randint(k_task, (BATCH,), 0, NUM_TASKS, dtype=jnp.int32)
    label = jax.random.randint(k_lab, (BATCH,), 0, NUM_VERB, dtype=jnp.int32)

    fwd = jax.jit(cross_prompt_forward)
    loss, score = fwd(params, inputx, mask, task_name, label)
    jax.block_until_ready((loss, score))

    acc_result = acc(score, label, None)
    out = {"loss": loss, "acc_result": acc_result}
    assert jnp.isfinite(out["loss"]) and score.shape == (BATCH, NUM_VERB)
    print("KERNEL_OK")
</pallas_src>

<mosaic_0001>
module attributes {stable_mosaic.version = 11 : i64} {
  func.func @_fused_forward_kernel(%arg0: i32, %arg1: memref<32x32xf32, #tpu.memory_space<vmem>>, %arg2: memref<8x32xf32, #tpu.memory_space<vmem>>, %arg3: memref<19x128xf32, #tpu.memory_space<vmem>>, %arg4: memref<32x16xf32, #tpu.memory_space<vmem>>, %arg5: memref<16x32xf32, #tpu.memory_space<vmem>>, %arg6: memref<32x96xf32, #tpu.memory_space<vmem>>, %arg7: memref<32x32xf32, #tpu.memory_space<vmem>>, %arg8: memref<32x128xf32, #tpu.memory_space<vmem>>, %arg9: memref<128x32xf32, #tpu.memory_space<vmem>>, %arg10: memref<32x128xf32, #tpu.memory_space<vmem>>, %arg11: memref<32x128xf32, #tpu.memory_space<vmem>>) attributes {dimension_semantics = [#tpu.dimension_semantics<arbitrary>], iteration_bounds = array<i64: 1>, scalar_prefetch = 0 : i64, scratch_operands = 0 : i64, tpu.core_type = #tpu.core_type<tc>, window_params = [{pipeline_mode = #tpu.pipeline_mode<synchronous>, transform_indices = @transform_0, window_bounds = array<i64: 32, 32>}, {pipeline_mode = #tpu.pipeline_mode<synchronous>, transform_indices = @transform_1, window_bounds = array<i64: 8, 32>}, {pipeline_mode = #tpu.pipeline_mode<synchronous>, transform_indices = @transform_2, window_bounds = array<i64: 19, 128>}, {pipeline_mode = #tpu.pipeline_mode<synchronous>, transform_indices = @transform_3, window_bounds = array<i64: 32, 16>}, {pipeline_mode = #tpu.pipeline_mode<synchronous>, transform_indices = @transform_4, window_bounds = array<i64: 16, 32>}, {pipeline_mode = #tpu.pipeline_mode<synchronous>, transform_indices = @transform_5, window_bounds = array<i64: 32, 96>}, {pipeline_mode = #tpu.pipeline_mode<synchronous>, transform_indices = @transform_6, window_bounds = array<i64: 32, 32>}, {pipeline_mode = #tpu.pipeline_mode<synchronous>, transform_indices = @transform_7, window_bounds = array<i64: 32, 128>}, {pipeline_mode = #tpu.pipeline_mode<synchronous>, transform_indices = @transform_8, window_bounds = array<i64: 128, 32>}, {pipeline_mode = #tpu.pipeline_mode<synchronous>, transform_indices = @transform_9, window_bounds = array<i64: 32, 128>}, {pipeline_mode = #tpu.pipeline_mode<synchronous>, transform_indices = @transform_10, window_bounds = array<i64: 32, 128>}]} {
    %c0 = arith.constant 0 : index
    %c0_0 = arith.constant 0 : index
    %0 = vector.load %arg2[%c0, %c0_0] : memref<8x32xf32, #tpu.memory_space<vmem>>, vector<8x32xf32>
    %c0_1 = arith.constant 0 : index
    %c0_2 = arith.constant 0 : index
    %1 = vector.load %arg4[%c0_1, %c0_2] : memref<32x16xf32, #tpu.memory_space<vmem>>, vector<32x16xf32>
    %cst = arith.constant dense<0.000000e+00> : vector<8x16xf32>
    %2 = tpu.matmul %0, %1, %cst {dimension_numbers = #tpu.dot_dimension_numbers<[1], [0], [0], [1], [0, 0, 1, 1], [], []>} : vector<8x32xf32>, vector<32x16xf32>, vector<8x16xf32> -> vector<8x16xf32>
    %c11 = arith.constant 11 : index
    %c0_3 = arith.constant 0 : index
    %3 = vector.load %arg3[%c11, %c0_3] : memref<19x128xf32, #tpu.memory_space<vmem>>, vector<1x16xf32>
    %4 = vector.broadcast %3 : vector<1x16xf32> to vector<8x16xf32>
    %5 = arith.addf %2, %4 : vector<8x16xf32>
    %cst_4 = arith.constant 0.000000e+00 : f32
    %6 = vector.broadcast %cst_4 : f32 to vector<8x16xf32>
    %7 = arith.maximumf %5, %6 : vector<8x16xf32>
    %c0_5 = arith.constant 0 : index
    %c0_6 = arith.constant 0 : index
    %8 = vector.load %arg5[%c0_5, %c0_6] : memref<16x32xf32, #tpu.memory_space<vmem>>, vector<16x32xf32>
    %cst_7 = arith.constant dense<0.000000e+00> : vector<8x32xf32>
    %9 = tpu.matmul %7, %8, %cst_7 {dimension_numbers = #tpu.dot_dimension_numbers<[1], [0], [0], [1], [0, 0, 1, 1], [], []>} : vector<8x16xf32>, vector<16x32xf32>, vector<8x32xf32> -> vector<8x32xf32>
    %c12 = arith.constant 12 : index
    %c0_8 = arith.constant 0 : index
    %10 = vector.load %arg3[%c12, %c0_8] : memref<19x128xf32, #tpu.memory_space<vmem>>, vector<1x32xf32>
    %11 = vector.broadcast %10 : vector<1x32xf32> to vector<8x32xf32>
    %12 = arith.addf %9, %11 : vector<8x32xf32>
    %c13 = arith.constant 13 : index
    %c0_9 = arith.constant 0 : index
    %13 = vector.load %arg3[%c13, %c0_9] : memref<19x128xf32, #tpu.memory_space<vmem>>, vector<4x32xf32>
    %c0_10 = arith.constant 0 : index
    %c0_11 = arith.constant 0 : index
    %14 = vector.load %arg1[%c0_10, %c0_11] : memref<32x32xf32, #tpu.memory_space<vmem>>, vector<32x32xf32>
    %15 = vector.extract_strided_slice %12 {offsets = [0, 0], sizes = [4, 32], strides = [1, 1]} : vector<8x32xf32> to vector<4x32xf32>
    %16 = arith.addf %15, %13 : vector<4x32xf32>
    %17 = vector.extract_strided_slice %14 {offsets = [4, 0], sizes = [12, 32], strides = [1, 1]} : vector<32x32xf32> to vector<12x32xf32>
    %18 = tpu.concatenate %16, %17 in 0 : vector<4x32xf32>, vector<12x32xf32> -> vector<16x32xf32>
    %19 = vector.extract_strided_slice %12 {offsets = [4, 0], sizes = [4, 32], strides = [1, 1]} : vector<8x32xf32> to vector<4x32xf32>
    %20 = arith.addf %19, %13 : vector<4x32xf32>
    %21 = vector.extract_strided_slice %14 {offsets = [20, 0], sizes = [12, 32], strides = [1, 1]} : vector<32x32xf32> to vector<12x32xf32>
    %22 = tpu.concatenate %20, %21 in 0 : vector<4x32xf32>, vector<12x32xf32> -> vector<16x32xf32>
    %23 = tpu.concatenate %18, %22 in 0 : vector<16x32xf32>, vector<16x32xf32> -> vector<32x32xf32>
    %c0_12 = arith.constant 0 : index
    %c0_13 = arith.constant 0 : index
    %24 = vector.load %arg3[%c0_12, %c0_13] : memref<19x128xf32, #tpu.memory_space<vmem>>, vector<1x32xf32>
    %c1 = arith.constant 1 : index
    %c0_14 = arith.constant 0 : index
    %25 = vector.load %arg3[%c1, %c0_14] : memref<19x128xf32, #tpu.memory_space<vmem>>, vector<1x32xf32>
    %cst_15 = arith.constant dense<0.000000e+00> : vector<32xf32>
    %26 = vector.multi_reduction <add>, %23, %cst_15 [1] : vector<32x32xf32> to vector<32xf32>
    %27 = vector.shape_cast %26 : vector<32xf32> to vector<32x1xf32>
    %cst_16 = arith.constant 3.200000e+01 : f32
    %28 = vector.broadcast %cst_16 : f32 to vector<32x1xf32>
    %29 = arith.divf %27, %28 : vector<32x1xf32>
    %30 = vector.broadcast %29 : vector<32x1xf32> to vector<32x32xf32>
    %31 = arith.subf %23, %30 : vector<32x32xf32>
    %32 = arith.mulf %31, %31 : vector<32x32xf32>
    %cst_17 = arith.constant dense<0.000000e+00> : vector<32xf32>
    %33 = vector.multi_reduction <add>, %32, %cst_17 [1] : vector<32x32xf32> to vector<32xf32>
    %34 = vector.shape_cast %33 : vector<32xf32> to vector<32x1xf32>
    %cst_18 = arith.constant 3.200000e+01 : f32
    %35 = vector.broadcast %cst_18 : f32 to vector<32x1xf32>
    %36 = arith.divf %34, %35 : vector<32x1xf32>
    %37 = vector.broadcast %29 : vector<32x1xf32> to vector<32x32xf32>
    %38 = arith.subf %23, %37 : vector<32x32xf32>
    %cst_19 = arith.constant 9.99999996E-13 : f32
    %39 = vector.broadcast %cst_19 : f32 to vector<32x1xf32>
    %40 = arith.addf %36, %39 : vector<32x1xf32>
    %41 = math.rsqrt %40 : vector<32x1xf32>
    %42 = vector.broadcast %41 : vector<32x1xf32> to vector<32x32xf32>
    %43 = arith.mulf %38, %42 : vector<32x32xf32>
    %44 = vector.broadcast %24 : vector<1x32xf32> to vector<32x32xf32>
    %45 = arith.mulf %43, %44 : vector<32x32xf32>
    %46 = vector.broadcast %25 : vector<1x32xf32> to vector<32x32xf32>
    %47 = arith.addf %45, %46 : vector<32x32xf32>
    %c0_20 = arith.constant 0 : index
    %c0_21 = arith.constant 0 : index
    %48 = vector.load %arg6[%c0_20, %c0_21] : memref<32x96xf32, #tpu.memory_space<vmem>>, vector<32x96xf32>
    %cst_22 = arith.constant dense<0.000000e+00> : vector<32x96xf32>
    %49 = tpu.matmul %47, %48, %cst_22 {dimension_numbers = #tpu.dot_dimension_numbers<[1], [0], [0], [1], [0, 0, 1, 1], [], []>} : vector<32x32xf32>, vector<32x96xf32>, vector<32x96xf32> -> vector<32x96xf32>
    %c6 = arith.constant 6 : index
    %c0_23 = arith.constant 0 : index
    %50 = vector.load %arg3[%c6, %c0_23] : memref<19x128xf32, #tpu.memory_space<vmem>>, vector<1x96xf32>
    %51 = vector.broadcast %50 : vector<1x96xf32> to vector<32x96xf32>
    %52 = arith.addf %49, %51 : vector<32x96xf32>
    %c17 = arith.constant 17 : index
    %c0_24 = arith.constant 0 : index
    %53 = vector.load %arg3[%c17, %c0_24] : memref<19x128xf32, #tpu.memory_space<vmem>>, vector<1x16xf32>
    %cst_25 = arith.constant 1.000000e+00 : f32
    %54 = vector.broadcast %cst_25 : f32 to vector<1x16xf32>
    %55 = arith.subf %54, %53 : vector<1x16xf32>
    %cst_26 = arith.constant -1.000000e+09 : f32
    %56 = vector.broadcast %cst_26 : f32 to vector<1x16xf32>
    %57 = arith.mulf %55, %56 : vector<1x16xf32>
    %58 = vector.extract_strided_slice %52 {offsets = [0, 0], sizes = [16, 16], strides = [1, 1]} : vector<32x96xf32> to vector<16x16xf32>
    %59 = vector.extract_strided_slice %52 {offsets = [0, 32], sizes = [16, 16], strides = [1, 1]} : vector<32x96xf32> to vector<16x16xf32>
    %60 = vector.extract_strided_slice %52 {offsets = [0, 64], sizes = [16, 16], strides = [1, 1]} : vector<32x96xf32> to vector<16x16xf32>
    %61 = tpu.transpose %59, [1, 0] : vector<16x16xf32> -> vector<16x16xf32>
    %cst_27 = arith.constant dense<0.000000e+00> : vector<16x16xf32>
    %62 = tpu.matmul %58, %61, %cst_27 {dimension_numbers = #tpu.dot_dimension_numbers<[1], [0], [0], [1], [0, 0, 1, 1], [], []>} : vector<16x16xf32>, vector<16x16xf32>, vector<16x16xf32> -> vector<16x16xf32>
    %cst_28 = arith.constant 2.500000e-01 : f32
    %63 = vector.broadcast %cst_28 : f32 to vector<16x16xf32>
    %64 = arith.mulf %62, %63 : vector<16x16xf32>
    %65 = vector.broadcast %57 : vector<1x16xf32> to vector<16x16xf32>
    %66 = arith.addf %64, %65 : vector<16x16xf32>
    %cst_29 = arith.constant dense<0xFF800000> : vector<16xf32>
    %67 = vector.multi_reduction <maximumf>, %66, %cst_29 [1] : vector<16x16xf32> to vector<16xf32>
    %68 = vector.shape_cast %67 : vector<16xf32> to vector<16x1xf32>
    %69 = vector.broadcast %68 : vector<16x1xf32> to vector<16x16xf32>
    %70 = arith.subf %66, %69 : vector<16x16xf32>
    %71 = math.exp %70 : vector<16x16xf32>
    %cst_30 = arith.constant dense<0.000000e+00> : vector<16xf32>
    %72 = vector.multi_reduction <add>, %71, %cst_30 [1] : vector<16x16xf32> to vector<16xf32>
    %73 = vector.shape_cast %72 : vector<16xf32> to vector<16x1xf32>
    %74 = tpu.reciprocal %73 {approx = true} : vector<16x1xf32> -> vector<16x1xf32>
    %75 = vector.broadcast %74 : vector<16x1xf32> to vector<16x16xf32>
    %76 = arith.mulf %71, %75 : vector<16x16xf32>
    %cst_31 = arith.constant dense<0.000000e+00> : vector<16x16xf32>
    %77 = tpu.matmul %76, %60, %cst_31 {dimension_numbers = #tpu.dot_dimension_numbers<[1], [0], [0], [1], [0, 0, 1, 1], [], []>} : vector<16x16xf32>, vector<16x16xf32>, vector<16x16xf32> -> vector<16x16xf32>
    %78 = vector.extract_strided_slice %52 {offsets = [0, 16], sizes = [16, 16], strides = [1, 1]} : vector<32x96xf32> to vector<16x16xf32>
    %79 = vector.extract_strided_slice %52 {offsets = [0, 48], sizes = [16, 16], strides = [1, 1]} : vector<32x96xf32> to vector<16x16xf32>
    %80 = vector.extract_strided_slice %52 {offsets = [0, 80], sizes = [16, 16], strides = [1, 1]} : vector<32x96xf32> to vector<16x16xf32>
    %81 = tpu.transpose %79, [1, 0] : vector<16x16xf32> -> vector<16x16xf32>
    %cst_32 = arith.constant dense<0.000000e+00> : vector<16x16xf32>
    %82 = tpu.matmul %78, %81, %cst_32 {dimension_numbers = #tpu.dot_dimension_numbers<[1], [0], [0], [1], [0, 0, 1, 1], [], []>} : vector<16x16xf32>, vector<16x16xf32>, vector<16x16xf32> -> vector<16x16xf32>
    %cst_33 = arith.constant 2.500000e-01 : f32
    %83 = vector.broadcast %cst_33 : f32 to vector<16x16xf32>
    %84 = arith.mulf %82, %83 : vector<16x16xf32>
    %85 = vector.broadcast %57 : vector<1x16xf32> to vector<16x16xf32>
    %86 = arith.addf %84, %85 : vector<16x16xf32>
    %cst_34 = arith.constant dense<0xFF800000> : vector<16xf32>
    %87 = vector.multi_reduction <maximumf>, %86, %cst_34 [1] : vector<16x16xf32> to vector<16xf32>
    %88 = vector.shape_cast %87 : vector<16xf32> to vector<16x1xf32>
    %89 = vector.broadcast %88 : vector<16x1xf32> to vector<16x16xf32>
    %90 = arith.subf %86, %89 : vector<16x16xf32>
    %91 = math.exp %90 : vector<16x16xf32>
    %cst_35 = arith.constant dense<0.000000e+00> : vector<16xf32>
    %92 = vector.multi_reduction <add>, %91, %cst_35 [1] : vector<16x16xf32> to vector<16xf32>
    %93 = vector.shape_cast %92 : vector<16xf32> to vector<16x1xf32>
    %94 = tpu.reciprocal %93 {approx = true} : vector<16x1xf32> -> vector<16x1xf32>
    %95 = vector.broadcast %94 : vector<16x1xf32> to vector<16x16xf32>
    %96 = arith.mulf %91, %95 : vector<16x16xf32>
    %cst_36 = arith.constant dense<0.000000e+00> : vector<16x16xf32>
    %97 = tpu.matmul %96, %80, %cst_36 {dimension_numbers = #tpu.dot_dimension_numbers<[1], [0], [0], [1], [0, 0, 1, 1], [], []>} : vector<16x16xf32>, vector<16x16xf32>, vector<16x16xf32> -> vector<16x16xf32>
    %98 = tpu.concatenate %77, %97 in 1 : vector<16x16xf32>, vector<16x16xf32> -> vector<16x32xf32>
    %c18 = arith.constant 18 : index
    %c0_37 = arith.constant 0 : index
    %99 = vector.load %arg3[%c18, %c0_37] : memref<19x128xf32, #tpu.memory_space<vmem>>, vector<1x16xf32>
    %cst_38 = arith.constant 1.000000e+00 : f32
    %100 = vector.broadcast %cst_38 : f32 to vector<1x16xf32>
    %101 = arith.subf %100, %99 : vector<1x16xf32>
    %cst_39 = arith.constant -1.000000e+09 : f32
    %102 = vector.broadcast %cst_39 : f32 to vector<1x16xf32>
    %103 = arith.mulf %101, %102 : vector<1x16xf32>
    %104 = vector.extract_strided_slice %52 {offsets = [16, 0], sizes = [16, 16], strides = [1, 1]} : vector<32x96xf32> to vector<16x16xf32>
    %105 = vector.extract_strided_slice %52 {offsets = [16, 32], sizes = [16, 16], strides = [1, 1]} : vector<32x96xf32> to vector<16x16xf32>
    %106 = vector.extract_strided_slice %52 {offsets = [16, 64], sizes = [16, 16], strides = [1, 1]} : vector<32x96xf32> to vector<16x16xf32>
    %107 = tpu.transpose %105, [1, 0] : vector<16x16xf32> -> vector<16x16xf32>
    %cst_40 = arith.constant dense<0.000000e+00> : vector<16x16xf32>
    %108 = tpu.matmul %104, %107, %cst_40 {dimension_numbers = #tpu.dot_dimension_numbers<[1], [0], [0], [1], [0, 0, 1, 1], [], []>} : vector<16x16xf32>, vector<16x16xf32>, vector<16x16xf32> -> vector<16x16xf32>
    %cst_41 = arith.constant 2.500000e-01 : f32
    %109 = vector.broadcast %cst_41 : f32 to vector<16x16xf32>
    %110 = arith.mulf %108, %109 : vector<16x16xf32>
    %111 = vector.broadcast %103 : vector<1x16xf32> to vector<16x16xf32>
    %112 = arith.addf %110, %111 : vector<16x16xf32>
    %cst_42 = arith.constant dense<0xFF800000> : vector<16xf32>
    %113 = vector.multi_reduction <maximumf>, %112, %cst_42 [1] : vector<16x16xf32> to vector<16xf32>
    %114 = vector.shape_cast %113 : vector<16xf32> to vector<16x1xf32>
    %115 = vector.broadcast %114 : vector<16x1xf32> to vector<16x16xf32>
    %116 = arith.subf %112, %115 : vector<16x16xf32>
    %117 = math.exp %116 : vector<16x16xf32>
    %cst_43 = arith.constant dense<0.000000e+00> : vector<16xf32>
    %118 = vector.multi_reduction <add>, %117, %cst_43 [1] : vector<16x16xf32> to vector<16xf32>
    %119 = vector.shape_cast %118 : vector<16xf32> to vector<16x1xf32>
    %120 = tpu.reciprocal %119 {approx = true} : vector<16x1xf32> -> vector<16x1xf32>
    %121 = vector.broadcast %120 : vector<16x1xf32> to vector<16x16xf32>
    %122 = arith.mulf %117, %121 : vector<16x16xf32>
    %cst_44 = arith.constant dense<0.000000e+00> : vector<16x16xf32>
    %123 = tpu.matmul %122, %106, %cst_44 {dimension_numbers = #tpu.dot_dimension_numbers<[1], [0], [0], [1], [0, 0, 1, 1], [], []>} : vector<16x16xf32>, vector<16x16xf32>, vector<16x16xf32> -> vector<16x16xf32>
    %124 = vector.extract_strided_slice %52 {offsets = [16, 16], sizes = [16, 16], strides = [1, 1]} : vector<32x96xf32> to vector<16x16xf32>
    %125 = vector.extract_strided_slice %52 {offsets = [16, 48], sizes = [16, 16], strides = [1, 1]} : vector<32x96xf32> to vector<16x16xf32>
    %126 = vector.extract_strided_slice %52 {offsets = [16, 80], sizes = [16, 16], strides = [1, 1]} : vector<32x96xf32> to vector<16x16xf32>
    %127 = tpu.transpose %125, [1, 0] : vector<16x16xf32> -> vector<16x16xf32>
    %cst_45 = arith.constant dense<0.000000e+00> : vector<16x16xf32>
    %128 = tpu.matmul %124, %127, %cst_45 {dimension_numbers = #tpu.dot_dimension_numbers<[1], [0], [0], [1], [0, 0, 1, 1], [], []>} : vector<16x16xf32>, vector<16x16xf32>, vector<16x16xf32> -> vector<16x16xf32>
    %cst_46 = arith.constant 2.500000e-01 : f32
    %129 = vector.broadcast %cst_46 : f32 to vector<16x16xf32>
    %130 = arith.mulf %128, %129 : vector<16x16xf32>
    %131 = vector.broadcast %103 : vector<1x16xf32> to vector<16x16xf32>
    %132 = arith.addf %130, %131 : vector<16x16xf32>
    %cst_47 = arith.constant dense<0xFF800000> : vector<16xf32>
    %133 = vector.multi_reduction <maximumf>, %132, %cst_47 [1] : vector<16x16xf32> to vector<16xf32>
    %134 = vector.shape_cast %133 : vector<16xf32> to vector<16x1xf32>
    %135 = vector.broadcast %134 : vector<16x1xf32> to vector<16x16xf32>
    %136 = arith.subf %132, %135 : vector<16x16xf32>
    %137 = math.exp %136 : vector<16x16xf32>
    %cst_48 = arith.constant dense<0.000000e+00> : vector<16xf32>
    %138 = vector.multi_reduction <add>, %137, %cst_48 [1] : vector<16x16xf32> to vector<16xf32>
    %139 = vector.shape_cast %138 : vector<16xf32> to vector<16x1xf32>
    %140 = tpu.reciprocal %139 {approx = true} : vector<16x1xf32> -> vector<16x1xf32>
    %141 = vector.broadcast %140 : vector<16x1xf32> to vector<16x16xf32>
    %142 = arith.mulf %137, %141 : vector<16x16xf32>
    %cst_49 = arith.constant dense<0.000000e+00> : vector<16x16xf32>
    %143 = tpu.matmul %142, %126, %cst_49 {dimension_numbers = #tpu.dot_dimension_numbers<[1], [0], [0], [1], [0, 0, 1, 1], [], []>} : vector<16x16xf32>, vector<16x16xf32>, vector<16x16xf32> -> vector<16x16xf32>
    %144 = tpu.concatenate %123, %143 in 1 : vector<16x16xf32>, vector<16x16xf32> -> vector<16x32xf32>
    %145 = tpu.concatenate %98, %144 in 0 : vector<16x32xf32>, vector<16x32xf32> -> vector<32x32xf32>
    %c0_50 = arith.constant 0 : index
    %c0_51 = arith.constant 0 : index
    %146 = vector.load %arg7[%c0_50, %c0_51] : memref<32x32xf32, #tpu.memory_space<vmem>>, vector<32x32xf32>
    %cst_52 = arith.constant dense<0.000000e+00> : vector<32x32xf32>
    %147 = tpu.matmul %145, %146, %cst_52 {dimension_numbers = #tpu.dot_dimension_numbers<[1], [0], [0], [1], [0, 0, 1, 1], [], []>} : vector<32x32xf32>, vector<32x32xf32>, vector<32x32xf32> -> vector<32x32xf32>
    %c7 = arith.constant 7 : index
    %c0_53 = arith.constant 0 : index
    %148 = vector.load %arg3[%c7, %c0_53] : memref<19x128xf32, #tpu.memory_space<vmem>>, vector<1x32xf32>
    %149 = vector.broadcast %148 : vector<1x32xf32> to vector<32x32xf32>
    %150 = arith.addf %147, %149 : vector<32x32xf32>
    %151 = arith.addf %47, %150 : vector<32x32xf32>
    %c2 = arith.constant 2 : index
    %c0_54 = arith.constant 0 : index
    %152 = vector.load %arg3[%c2, %c0_54] : memref<19x128xf32, #tpu.memory_space<vmem>>, vector<1x32xf32>
    %c3 = arith.constant 3 : index
    %c0_55 = arith.constant 0 : index
    %153 = vector.load %arg3[%c3, %c0_55] : memref<19x128xf32, #tpu.memory_space<vmem>>, vector<1x32xf32>
    %cst_56 = arith.constant dense<0.000000e+00> : vector<32xf32>
    %154 = vector.multi_reduction <add>, %151, %cst_56 [1] : vector<32x32xf32> to vector<32xf32>
    %155 = vector.shape_cast %154 : vector<32xf32> to vector<32x1xf32>
    %cst_57 = arith.constant 3.200000e+01 : f32
    %156 = vector.broadcast %cst_57 : f32 to vector<32x1xf32>
    %157 = arith.divf %155, %156 : vector<32x1xf32>
    %158 = vector.broadcast %157 : vector<32x1xf32> to vector<32x32xf32>
    %159 = arith.subf %151, %158 : vector<32x32xf32>
    %160 = arith.mulf %159, %159 : vector<32x32xf32>
    %cst_58 = arith.constant dense<0.000000e+00> : vector<32xf32>
    %161 = vector.multi_reduction <add>, %160, %cst_58 [1] : vector<32x32xf32> to vector<32xf32>
    %162 = vector.shape_cast %161 : vector<32xf32> to vector<32x1xf32>
    %cst_59 = arith.constant 3.200000e+01 : f32
    %163 = vector.broadcast %cst_59 : f32 to vector<32x1xf32>
    %164 = arith.divf %162, %163 : vector<32x1xf32>
    %165 = vector.broadcast %157 : vector<32x1xf32> to vector<32x32xf32>
    %166 = arith.subf %151, %165 : vector<32x32xf32>
    %cst_60 = arith.constant 9.99999996E-13 : f32
    %167 = vector.broadcast %cst_60 : f32 to vector<32x1xf32>
    %168 = arith.addf %164, %167 : vector<32x1xf32>
    %169 = math.rsqrt %168 : vector<32x1xf32>
    %170 = vector.broadcast %169 : vector<32x1xf32> to vector<32x32xf32>
    %171 = arith.mulf %166, %170 : vector<32x32xf32>
    %172 = vector.broadcast %152 : vector<1x32xf32> to vector<32x32xf32>
    %173 = arith.mulf %171, %172 : vector<32x32xf32>
    %174 = vector.broadcast %153 : vector<1x32xf32> to vector<32x32xf32>
    %175 = arith.addf %173, %174 : vector<32x32xf32>
    %c0_61 = arith.constant 0 : index
    %c0_62 = arith.constant 0 : index
    %176 = vector.load %arg8[%c0_61, %c0_62] : memref<32x128xf32, #tpu.memory_space<vmem>>, vector<32x128xf32>
    %cst_63 = arith.constant dense<0.000000e+00> : vector<32x128xf32>
    %177 = tpu.matmul %175, %176, %cst_63 {dimension_numbers = #tpu.dot_dimension_numbers<[1], [0], [0], [1], [0, 0, 1, 1], [], []>} : vector<32x32xf32>, vector<32x128xf32>, vector<32x128xf32> -> vector<32x128xf32>
    %c8 = arith.constant 8 : index
    %c0_64 = arith.constant 0 : index
    %178 = vector.load %arg3[%c8, %c0_64] : memref<19x128xf32, #tpu.memory_space<vmem>>, vector<1x128xf32>
    %179 = vector.broadcast %178 : vector<1x128xf32> to vector<32x128xf32>
    %180 = arith.addf %177, %179 : vector<32x128xf32>
    %181 = arith.mulf %180, %180 : vector<32x128xf32>
    %182 = arith.mulf %180, %181 : vector<32x128xf32>
    %cst_65 = arith.constant 4.471500e-02 : f32
    %183 = vector.broadcast %cst_65 : f32 to vector<32x128xf32>
    %184 = arith.mulf %183, %182 : vector<32x128xf32>
    %185 = arith.addf %180, %184 : vector<32x128xf32>
    %cst_66 = arith.constant 0.797884583 : f32
    %186 = vector.broadcast %cst_66 : f32 to vector<32x128xf32>
    %187 = arith.mulf %186, %185 : vector<32x128xf32>
    %188 = math.tanh %187 : vector<32x128xf32>
    %cst_67 = arith.constant 1.000000e+00 : f32
    %189 = vector.broadcast %cst_67 : f32 to vector<32x128xf32>
    %190 = arith.addf %189, %188 : vector<32x128xf32>
    %cst_68 = arith.constant 5.000000e-01 : f32
    %191 = vector.broadcast %cst_68 : f32 to vector<32x128xf32>
    %192 = arith.mulf %191, %190 : vector<32x128xf32>
    %193 = arith.mulf %180, %192 : vector<32x128xf32>
    %c0_69 = arith.constant 0 : index
    %c0_70 = arith.constant 0 : index
    %194 = vector.load %arg9[%c0_69, %c0_70] : memref<128x32xf32, #tpu.memory_space<vmem>>, vector<128x32xf32>
    %cst_71 = arith.constant dense<0.000000e+00> : vector<32x32xf32>
    %195 = tpu.matmul %193, %194, %cst_71 {dimension_numbers = #tpu.dot_dimension_numbers<[1], [0], [0], [1], [0, 0, 1, 1], [], []>} : vector<32x128xf32>, vector<128x32xf32>, vector<32x32xf32> -> vector<32x32xf32>
    %c9 = arith.constant 9 : index
    %c0_72 = arith.constant 0 : index
    %196 = vector.load %arg3[%c9, %c0_72] : memref<19x128xf32, #tpu.memory_space<vmem>>, vector<1x32xf32>
    %197 = vector.broadcast %196 : vector<1x32xf32> to vector<32x32xf32>
    %198 = arith.addf %195, %197 : vector<32x32xf32>
    %199 = arith.addf %175, %198 : vector<32x32xf32>
    %c4 = arith.constant 4 : index
    %c0_73 = arith.constant 0 : index
    %200 = vector.load %arg3[%c4, %c0_73] : memref<19x128xf32, #tpu.memory_space<vmem>>, vector<1x32xf32>
    %c5 = arith.constant 5 : index
    %c0_74 = arith.constant 0 : index
    %201 = vector.load %arg3[%c5, %c0_74] : memref<19x128xf32, #tpu.memory_space<vmem>>, vector<1x32xf32>
    %cst_75 = arith.constant dense<0.000000e+00> : vector<32xf32>
    %202 = vector.multi_reduction <add>, %199, %cst_75 [1] : vector<32x32xf32> to vector<32xf32>
    %203 = vector.shape_cast %202 : vector<32xf32> to vector<32x1xf32>
    %cst_76 = arith.constant 3.200000e+01 : f32
    %204 = vector.broadcast %cst_76 : f32 to vector<32x1xf32>
    %205 = arith.divf %203, %204 : vector<32x1xf32>
    %206 = vector.broadcast %205 : vector<32x1xf32> to vector<32x32xf32>
    %207 = arith.subf %199, %206 : vector<32x32xf32>
    %208 = arith.mulf %207, %207 : vector<32x32xf32>
    %cst_77 = arith.constant dense<0.000000e+00> : vector<32xf32>
    %209 = vector.multi_reduction <add>, %208, %cst_77 [1] : vector<32x32xf32> to vector<32xf32>
    %210 = vector.shape_cast %209 : vector<32xf32> to vector<32x1xf32>
    %cst_78 = arith.constant 3.200000e+01 : f32
    %211 = vector.broadcast %cst_78 : f32 to vector<32x1xf32>
    %212 = arith.divf %210, %211 : vector<32x1xf32>
    %213 = vector.broadcast %205 : vector<32x1xf32> to vector<32x32xf32>
    %214 = arith.subf %199, %213 : vector<32x32xf32>
    %cst_79 = arith.constant 9.99999996E-13 : f32
    %215 = vector.broadcast %cst_79 : f32 to vector<32x1xf32>
    %216 = arith.addf %212, %215 : vector<32x1xf32>
    %217 = math.rsqrt %216 : vector<32x1xf32>
    %218 = vector.broadcast %217 : vector<32x1xf32> to vector<32x32xf32>
    %219 = arith.mulf %214, %218 : vector<32x32xf32>
    %220 = vector.broadcast %200 : vector<1x32xf32> to vector<32x32xf32>
    %221 = arith.mulf %219, %220 : vector<32x32xf32>
    %222 = vector.broadcast %201 : vector<1x32xf32> to vector<32x32xf32>
    %223 = arith.addf %221, %222 : vector<32x32xf32>
    %c0_80 = arith.constant 0 : index
    %c0_81 = arith.constant 0 : index
    %224 = vector.load %arg10[%c0_80, %c0_81] : memref<32x128xf32, #tpu.memory_space<vmem>>, vector<32x128xf32>
    %cst_82 = arith.constant dense<0.000000e+00> : vector<32x128xf32>
    %225 = tpu.matmul %223, %224, %cst_82 {dimension_numbers = #tpu.dot_dimension_numbers<[1], [0], [0], [1], [0, 0, 1, 1], [], []>} : vector<32x32xf32>, vector<32x128xf32>, vector<32x128xf32> -> vector<32x128xf32>
    %c10 = arith.constant 10 : index
    %c0_83 = arith.constant 0 : index
    %226 = vector.load %arg3[%c10, %c0_83] : memref<19x128xf32, #tpu.memory_space<vmem>>, vector<1x128xf32>
    %227 = vector.broadcast %226 : vector<1x128xf32> to vector<32x128xf32>
    %228 = arith.addf %225, %227 : vector<32x128xf32>
    %c0_84 = arith.constant 0 : index
    %c0_85 = arith.constant 0 : index
    %229 = vector.load %arg11[%c0_84, %c0_85] : memref<32x128xf32, #tpu.memory_space<vmem>>, vector<32x128xf32>
    tpu.vector_store %arg11[%c0_84, %c0_85], %228 {strides = array<i32>} : memref<32x128xf32, #tpu.memory_space<vmem>>, vector<32x128xf32>,
    return
  }
  func.func @transform_0(%arg0: i32) -> (i32, i32) {
    %c0_i32 = arith.constant 0 : i32
    %c0_i32_0 = arith.constant 0 : i32
    %c0_i32_1 = arith.constant 0 : i32
    return %c0_i32, %c0_i32_0 : i32, i32
  }
  func.func @transform_1(%arg0: i32) -> (i32, i32) {
    %c0_i32 = arith.constant 0 : i32
    %c0_i32_0 = arith.constant 0 : i32
    %c0_i32_1 = arith.constant 0 : i32
    return %c0_i32, %c0_i32_0 : i32, i32
  }
  func.func @transform_2(%arg0: i32) -> (i32, i32) {
    %c0_i32 = arith.constant 0 : i32
    %c0_i32_0 = arith.constant 0 : i32
    %c0_i32_1 = arith.constant 0 : i32
    return %c0_i32, %c0_i32_0 : i32, i32
  }
  func.func @transform_3(%arg0: i32) -> (i32, i32) {
    %c0_i32 = arith.constant 0 : i32
    %c0_i32_0 = arith.constant 0 : i32
    %c0_i32_1 = arith.constant 0 : i32
    return %c0_i32, %c0_i32_0 : i32, i32
  }
  func.func @transform_4(%arg0: i32) -> (i32, i32) {
    %c0_i32 = arith.constant 0 : i32
    %c0_i32_0 = arith.constant 0 : i32
    %c0_i32_1 = arith.constant 0 : i32
    return %c0_i32, %c0_i32_0 : i32, i32
  }
  func.func @transform_5(%arg0: i32) -> (i32, i32) {
    %c0_i32 = arith.constant 0 : i32
    %c0_i32_0 = arith.constant 0 : i32
    %c0_i32_1 = arith.constant 0 : i32
    return %c0_i32, %c0_i32_0 : i32, i32
  }
  func.func @transform_6(%arg0: i32) -> (i32, i32) {
    %c0_i32 = arith.constant 0 : i32
    %c0_i32_0 = arith.constant 0 : i32
    %c0_i32_1 = arith.constant 0 : i32
    return %c0_i32, %c0_i32_0 : i32, i32
  }
  func.func @transform_7(%arg0: i32) -> (i32, i32) {
    %c0_i32 = arith.constant 0 : i32
    %c0_i32_0 = arith.constant 0 : i32
    %c0_i32_1 = arith.constant 0 : i32
    return %c0_i32, %c0_i32_0 : i32, i32
  }
  func.func @transform_8(%arg0: i32) -> (i32, i32) {
    %c0_i32 = arith.constant 0 : i32
    %c0_i32_0 = arith.constant 0 : i32
    %c0_i32_1 = arith.constant 0 : i32
    return %c0_i32, %c0_i32_0 : i32, i32
  }
  func.func @transform_9(%arg0: i32) -> (i32, i32) {
    %c0_i32 = arith.constant 0 : i32
    %c0_i32_0 = arith.constant 0 : i32
    %c0_i32_1 = arith.constant 0 : i32
    return %c0_i32, %c0_i32_0 : i32, i32
  }
  func.func @transform_10(%arg0: i32) -> (i32, i32) {
    %c0_i32 = arith.constant 0 : i32
    %c0_i32_0 = arith.constant 0 : i32
    %c0_i32_1 = arith.constant 0 : i32
    return %c0_i32, %c0_i32_0 : i32, i32
  }
}

</mosaic_0001>

<llo_original>
// kernel: cross_prompt_forward.1
$region0: #{cross_prompt_forward.1}
  #allocation0 [shape = 'u32[]', space=smem, size = 0x4, offset = 0x4, fixed_abs, tag = 'smem constant byte address 0x4 - core index']
  #allocation1 [shape = 'u32[72,128]{1,0:T(1,128)}', space=vmem, size = 0x9000, scoped, tag = 'internal scratch']
  %s0 = inlined_call_operand.vmem [shape: f32[32,32], index: 0, kind: input, shape index: {}]
  %s1 = inlined_call_operand.vmem [shape: f32[8,32], index: 1, kind: input, shape index: {}]
  %s2 = inlined_call_operand.vmem [shape: f32[19,128], index: 2, kind: input, shape index: {}]
  %s3 = inlined_call_operand.vmem [shape: f32[32,16], index: 3, kind: input, shape index: {}]
  %s4 = inlined_call_operand.vmem [shape: f32[16,32], index: 4, kind: input, shape index: {}]
  %s5 = inlined_call_operand.vmem [shape: f32[32,96], index: 5, kind: input, shape index: {}]
  %s6 = inlined_call_operand.vmem [shape: f32[32,32], index: 6, kind: input, shape index: {}]
  %s7 = inlined_call_operand.vmem [shape: f32[32,128], index: 7, kind: input, shape index: {}]
  %s8 = inlined_call_operand.vmem [shape: f32[128,32], index: 8, kind: input, shape index: {}]
  %s9 = inlined_call_operand.vmem [shape: f32[32,128], index: 9, kind: input, shape index: {}]
  %s10 = inlined_call_operand.vmem [shape: f32[32,128], index: 10, kind: output, shape index: {}]
  %s11 = sld [smem:[#allocation0]]
  $region50: #{cross_prompt_forward.1} parent=0
    _
  %s13 = ssub.s32 1, %s11
  %s14 = scalar_select 0, %s13, %s11
  // Predicated region
  $region2: #{cross_prompt_forward.1} parent=0 // pred_check
    _
  $region3: #{cross_prompt_forward.1} parent=0 // pred_check_branch
    %16 = sbr.rel (0) target = $region5
  $region4: #{cross_prompt_forward.1} parent=0 // pred_region
    _
  $region5: #{cross_prompt_forward.1} parent=0 // pred_fallthru
    _
  // Predicated region
  $region6: #{cross_prompt_forward.1} parent=0 // pred_check
    _
  $region7: #{cross_prompt_forward.1} parent=0 // pred_check_branch
    %18 = sbr.rel (0) target = $region9
  $region8: #{cross_prompt_forward.1} parent=0 // pred_region
    _
  $region9: #{cross_prompt_forward.1} parent=0 // pred_fallthru
    _
  // Predicated region
  $region10: #{cross_prompt_forward.1} parent=0 // pred_check
    _
  $region11: #{cross_prompt_forward.1} parent=0 // pred_check_branch
    %20 = sbr.rel (0) target = $region13
  $region12: #{cross_prompt_forward.1} parent=0 // pred_region
    _
  $region13: #{cross_prompt_forward.1} parent=0 // pred_fallthru
    _
  // Predicated region
  $region14: #{cross_prompt_forward.1} parent=0 // pred_check
    _
  $region15: #{cross_prompt_forward.1} parent=0 // pred_check_branch
    %22 = sbr.rel (0) target = $region17
  $region16: #{cross_prompt_forward.1} parent=0 // pred_region
    _
  $region17: #{cross_prompt_forward.1} parent=0 // pred_fallthru
    _
  // Predicated region
  $region18: #{cross_prompt_forward.1} parent=0 // pred_check
    _
  $region19: #{cross_prompt_forward.1} parent=0 // pred_check_branch
    %24 = sbr.rel (0) target = $region21
  $region20: #{cross_prompt_forward.1} parent=0 // pred_region
    _
  $region21: #{cross_prompt_forward.1} parent=0 // pred_fallthru
    _
  // Predicated region
  $region22: #{cross_prompt_forward.1} parent=0 // pred_check
    _
  $region23: #{cross_prompt_forward.1} parent=0 // pred_check_branch
    %26 = sbr.rel (0) target = $region25
  $region24: #{cross_prompt_forward.1} parent=0 // pred_region
    _
  $region25: #{cross_prompt_forward.1} parent=0 // pred_fallthru
    _
  // Predicated region
  $region26: #{cross_prompt_forward.1} parent=0 // pred_check
    _
  $region27: #{cross_prompt_forward.1} parent=0 // pred_check_branch
    %28 = sbr.rel (0) target = $region29
  $region28: #{cross_prompt_forward.1} parent=0 // pred_region
    _
  $region29: #{cross_prompt_forward.1} parent=0 // pred_fallthru
    _
  // Predicated region
  $region30: #{cross_prompt_forward.1} parent=0 // pred_check
    _
  $region31: #{cross_prompt_forward.1} parent=0 // pred_check_branch
    %30 = sbr.rel (0) target = $region33
  $region32: #{cross_prompt_forward.1} parent=0 // pred_region
    _
  $region33: #{cross_prompt_forward.1} parent=0 // pred_fallthru
    _
  // Predicated region
  $region34: #{cross_prompt_forward.1} parent=0 // pred_check
    _
  $region35: #{cross_prompt_forward.1} parent=0 // pred_check_branch
    %32 = sbr.rel (0) target = $region37
  $region36: #{cross_prompt_forward.1} parent=0 // pred_region
    _
  $region37: #{cross_prompt_forward.1} parent=0 // pred_fallthru
    _
  // Predicated region
  $region38: #{cross_prompt_forward.1} parent=0 // pred_check
    _
  $region39: #{cross_prompt_forward.1} parent=0 // pred_check_branch
    %34 = sbr.rel (0) target = $region41
  $region40: #{cross_prompt_forward.1} parent=0 // pred_region
    _
  $region41: #{cross_prompt_forward.1} parent=0 // pred_fallthru
    _
  %v35 = vld [vmem:[%s1] sm:$0xff]
  %v36 = vld [vmem:[%s3] sm:$0xff]
  %v37 = vld [vmem:[%s3 + $0x8] sm:$0xff]
  %v38 = vld [vmem:[%s3 + $0x10] sm:$0xff]
  %v39 = vld [vmem:[%s3 + $0x18] sm:$0xff]
  %v40 = vld [vmem:[%s2 + $0xb] sm:$0x1]
  %v41 = vperm.slane %v40, 0
  %vm42 = vcmask 261120
  %v44 = vsel %vm42, %v35, 0
  %46 = vmatpush.msra.mxu0 0.0
  %47 = vmatpush.msra.mxu0 0.0
  %48 = vmatpush.msra.mxu0 0.0
  %49 = vmatpush.msra.mxu0 0.0
  %50 = vmatpush.msra.mxu0 0.0
  %51 = vmatpush.msra.mxu0 0.0
  %52 = vmatpush.msra.mxu0 0.0
  %53 = vmatpush.msra.mxu0 0.0
  %54 = vmatpush.msra.mxu0 0.0
  %55 = vmatpush.msra.mxu0 0.0
  %56 = vmatpush.msra.mxu0 0.0
  %57 = vmatpush.msra.mxu0 0.0
  %58 = vmatpush.msra.mxu0 %v39
  %59 = vmatpush.msra.mxu0 %v38
  %60 = vmatpush.msra.mxu0 %v37
  %61 = vmatpush.msra.mxu0 %v36
  %62 = vmatmul.f32.gmra.mxu0 %v44
  %v63 = vpop.f32.mrf.mxu0
  %v64 = vadd.f32 %v41, %v63
  %65 = vdwg.mxu0
  %v66 = vmax.f32 %v64, 0.0
  %v67 = vld [vmem:[%s4] sm:$0xff]
  %v68 = vld [vmem:[%s4 + $0x8] sm:$0xff]
  %v69 = vld [vmem:[%s2 + $0xc] sm:$0x1]
  %v70 = vperm.slane %v69, 0
  %vm71 = vcmask 130048
  %v73 = vsel %vm71, %v66, 0
  %75 = vmatpush.msra.mxu0 0.0
  %76 = vmatpush.msra.mxu0 0.0
  %77 = vmatpush.msra.mxu0 0.0
  %78 = vmatpush.msra.mxu0 0.0
  %79 = vmatpush.msra.mxu0 0.0
  %80 = vmatpush.msra.mxu0 0.0
  %81 = vmatpush.msra.mxu0 0.0
  %82 = vmatpush.msra.mxu0 0.0
  %83 = vmatpush.msra.mxu0 0.0
  %84 = vmatpush.msra.mxu0 0.0
  %85 = vmatpush.msra.mxu0 0.0
  %86 = vmatpush.msra.mxu0 0.0
  %87 = vmatpush.msra.mxu0 0.0
  %88 = vmatpush.msra.mxu0 0.0
  %89 = vmatpush.msra.mxu0 %v68
  %90 = vmatpush.msra.mxu0 %v67
  %91 = vmatmul.f32.gmra.mxu0 %v73
  %v92 = vpop.f32.mrf.mxu0
  %v93 = vadd.f32 %v70, %v92
  %94 = vdwg.mxu0
  %v95 = vld [vmem:[%s2 + $0xd] sm:$0xf]
  %v96 = vld [vmem:[%s0] sm:$0xff]
  %v97 = vld [vmem:[%s0 + $0x8] sm:$0xff]
  %v98 = vld [vmem:[%s0 + $0x10] sm:$0xff]
  %v99 = vld [vmem:[%s0 + $0x18] sm:$0xff]
  %v100 = vadd.f32 %v93, %v95
  %vm101 = vcmask 1043456
  %v102 = vsel %vm101, %v100, %v96
  %v104 = vrot.slane %v95, 4
  %v106 = vadd.f32 %v93, %v104
  %v108 = vrot.slane %v106, 4
  %v110 = vsel %vm101, %v108, %v98
  %v111 = vld [vmem:[%s2] sm:$0x1]
  %v112 = vld [vmem:[%s2 + $0x1] sm:$0x1]
  %v113 = vsel %vm42, %v102, 0.0
  %114 = vadd.xlane.f32.xlu0 %v113
  %v115 = vpop.xlane.xlu0 %114
  %v116 = vsel %vm42, %v97, 0.0
  %117 = vadd.xlane.f32.xlu0 %v116
  %v118 = vpop.xlane.xlu0 %117
  %v119 = vsel %vm42, %v110, 0.0
  %120 = vadd.xlane.f32.xlu0 %v119
  %v121 = vpop.xlane.xlu0 %120
  %v122 = vsel %vm42, %v99, 0.0
  %123 = vadd.xlane.f32.xlu0 %v122
  %v124 = vpop.xlane.xlu0 %123
  %v125 = vrcp.pop 32.0
  %v126 = vmul.f32 32.0, %v125
  %v127 = vsub.f32 1.0, %v126
  %v128 = vmul.f32 %v125, %v127
  %v129 = vadd.f32 %v125, %v128
  %vm130 = vweird.f32 %v125
  %v131 = vsel %vm130, %v125, %v129
  %v132 = vmul.f32 %v115, %v131
  %v133 = vmul.f32 %v118, %v131
  %v134 = vmul.f32 %v121, %v131
  %v135 = vmul.f32 %v124, %v131
  %v136 = vsub.f32 %v102, %v132
  %v137 = vsub.f32 %v97, %v133
  %v138 = vsub.f32 %v110, %v134
  %v139 = vsub.f32 %v99, %v135
  %v140 = vmul.f32 %v136, %v136
  %v141 = vmul.f32 %v137, %v137
  %v142 = vmul.f32 %v138, %v138
  %v143 = vmul.f32 %v139, %v139
  %v144 = vsel %vm42, %v140, 0.0
  %145 = vadd.xlane.f32.xlu0 %v144
  %v146 = vpop.xlane.xlu0 %145
  %v147 = vsel %vm42, %v141, 0.0
  %148 = vadd.xlane.f32.xlu0 %v147
  %v149 = vpop.xlane.xlu0 %148
  %v150 = vsel %vm42, %v142, 0.0
  %151 = vadd.xlane.f32.xlu0 %v150
  %v152 = vpop.xlane.xlu0 %151
  %v153 = vsel %vm42, %v143, 0.0
  %154 = vadd.xlane.f32.xlu0 %v153
  %v155 = vpop.xlane.xlu0 %154
  %v156 = vmul.f32 %v146, %v131
  %v157 = vmul.f32 %v149, %v131
  %v158 = vmul.f32 %v152, %v131
  %v159 = vmul.f32 %v155, %v131
  %v160 = vadd.f32 %v156, 1e-12
  %v161 = vadd.f32 %v157, 1e-12
  %v162 = vadd.f32 %v158, 1e-12
  %v163 = vadd.f32 %v159, 1e-12
  %v164 = vrsqrt.pop %v160
  %v165 = vmul.f32 %v164, %v160
  %v166 = vmul.f32 %v165, %v164
  %v167 = vmul.f32 0.5, %v166
  %v168 = vsub.f32 1.5, %v167
  %v169 = vmul.f32 %v164, %v168
  %vm170 = vweird.f32 %v160
  %vm171 = vweird.f32 %v164
  %vm172 = vmor %vm170, %vm171
  %v173 = vsel %vm172, %v164, %v169
  %v174 = vrsqrt.pop %v161
  %v175 = vmul.f32 %v174, %v161
  %v176 = vmul.f32 %v175, %v174
  %v177 = vmul.f32 0.5, %v176
  %v178 = vsub.f32 1.5, %v177
  %v179 = vmul.f32 %v174, %v178
  %vm180 = vweird.f32 %v161
  %vm181 = vweird.f32 %v174
  %vm182 = vmor %vm180, %vm181
  %v183 = vsel %vm182, %v174, %v179
  %v184 = vrsqrt.pop %v162
  %v185 = vmul.f32 %v184, %v162
  %v186 = vmul.f32 %v185, %v184
  %v187 = vmul.f32 0.5, %v186
  %v188 = vsub.f32 1.5, %v187
  %v189 = vmul.f32 %v184, %v188
  %vm190 = vweird.f32 %v162
  %vm191 = vweird.f32 %v184
  %vm192 = vmor %vm190, %vm191
  %v193 = vsel %vm192, %v184, %v189
  %v194 = vrsqrt.pop %v163
  %v195 = vmul.f32 %v194, %v163
  %v196 = vmul.f32 %v195, %v194
  %v197 = vmul.f32 0.5, %v196
  %v198 = vsub.f32 1.5, %v197
  %v199 = vmul.f32 %v194, %v198
  %vm200 = vweird.f32 %v163
  %vm201 = vweird.f32 %v194
  %vm202 = vmor %vm200, %vm201
  %v203 = vsel %vm202, %v194, %v199
  %v204 = vmul.f32 %v136, %v173
  %v205 = vmul.f32 %v137, %v183
  %v206 = vmul.f32 %v138, %v193
  %v207 = vmul.f32 %v139, %v203
  %v208 = vperm.slane %v111, 0
  %v209 = vmul.f32 %v204, %v208
  %v210 = vmul.f32 %v205, %v208
  %v211 = vmul.f32 %v206, %v208
  %v212 = vmul.f32 %v207, %v208
  %v213 = vperm.slane %v112, 0
  %v214 = vadd.f32 %v209, %v213
  %v215 = vadd.f32 %v210, %v213
  %v216 = vadd.f32 %v211, %v213
  %v217 = vadd.f32 %v212, %v213
  %v218 = vld [vmem:[%s5] sm:$0xff]
  %v219 = vld [vmem:[%s5 + $0x8] sm:$0xff]
  %v220 = vld [vmem:[%s5 + $0x10] sm:$0xff]
  %v221 = vld [vmem:[%s5 + $0x18] sm:$0xff]
  %v222 = vld [vmem:[%s2 + $0x6] sm:$0x1]
  %v223 = vperm.slane %v222, 0
  %v225 = vsel %vm42, %v214, 0
  %v228 = vsel %vm42, %v215, 0
  %v231 = vsel %vm42, %v216, 0
  %v234 = vsel %vm42, %v217, 0
  %236 = vmatpush.msra.mxu0 0.0
  %237 = vmatpush.msra.mxu0 0.0
  %238 = vmatpush.msra.mxu0 0.0
  %239 = vmatpush.msra.mxu0 0.0
  %240 = vmatpush.msra.mxu0 0.0
  %241 = vmatpush.msra.mxu0 0.0
  %242 = vmatpush.msra.mxu0 0.0
  %243 = vmatpush.msra.mxu0 0.0
  %244 = vmatpush.msra.mxu0 0.0
  %245 = vmatpush.msra.mxu0 0.0
  %246 = vmatpush.msra.mxu0 0.0
  %247 = vmatpush.msra.mxu0 0.0
  %248 = vmatpush.msra.mxu0 %v221
  %249 = vmatpush.msra.mxu0 %v220
  %250 = vmatpush.msra.mxu0 %v219
  %251 = vmatpush.msra.mxu0 %v218
  %252 = vmatmul.f32.gmra.mxu0 %v225
  %v253 = vpop.f32.mrf.mxu0
  %v254 = vadd.f32 %v223, %v253
  %255 = vmatmul.f32.gmra.mxu0 %v228
  %v256 = vpop.f32.mrf.mxu0
  %v257 = vadd.f32 %v223, %v256
  %258 = vmatmul.f32.gmra.mxu0 %v231
  %v259 = vpop.f32.mrf.mxu0
  %v260 = vadd.f32 %v223, %v259
  %261 = vmatmul.f32.gmra.mxu0 %v234
  %v262 = vpop.f32.mrf.mxu0
  %v263 = vadd.f32 %v223, %v262
  %264 = vdwg.mxu0
  %v265 = vld [vmem:[%s2 + $0x11] sm:$0x1]
  %v266 = vsub.f32 1.0, %v265
  %v267 = vmul.f32 %v266, -1e+09
  %270 = vrot.lane.b32.xlu0 %v254, 96
  %v271 = vpop.permute.xlu0 %270
  %272 = vrot.lane.b32.xlu0 %v257, 96
  %v273 = vpop.permute.xlu0 %272
  %v274 = vsel %vm71, %v254, 0
  %v276 = vsel %vm71, %v257, 0
  %v278 = vsel %vm71, %v271, 0
  %v280 = vsel %vm71, %v273, 0
  %282 = vmatpush.xpose.msra.mxu0 0.0
  %283 = vmatpush.xpose.msra.mxu0 0.0
  %284 = vmatpush.xpose.msra.mxu0 0.0
  %285 = vmatpush.xpose.msra.mxu0 0.0
  %286 = vmatpush.xpose.msra.mxu0 0.0
  %287 = vmatpush.xpose.msra.mxu0 0.0
  %288 = vmatpush.xpose.msra.mxu0 0.0
  %289 = vmatpush.xpose.msra.mxu0 0.0
  %290 = vmatpush.xpose.msra.mxu0 0.0
  %291 = vmatpush.xpose.msra.mxu0 0.0
  %292 = vmatpush.xpose.msra.mxu0 0.0
  %293 = vmatpush.xpose.msra.mxu0 0.0
  %294 = vmatpush.xpose.msra.mxu0 0.0
  %295 = vmatpush.xpose.msra.mxu0 0.0
  %296 = vmatpush.xpose.msra.mxu0 %v280
  %297 = vmatpush.xpose.msra.mxu0 %v278
  %298 = vmatmul.f32.gmra.mxu0 %v274
  %v299 = vpop.f32.mrf.mxu0
  %v300 = vadd.f32 0.0, %v299
  %301 = vmatmul.f32.gmra.mxu0 %v276
  %v302 = vpop.f32.mrf.mxu0
  %v303 = vadd.f32 0.0, %v302
  %304 = vdwg.mxu0
  %v305 = vmul.f32 %v300, 0.25
  %v306 = vmul.f32 %v303, 0.25
  %v307 = vperm.slane %v267, 0
  %v308 = vadd.f32 %v305, %v307
  %v309 = vadd.f32 %v306, %v307
  %v310 = vsel %vm71, %v308, -inf
  %311 = vmax.xlane.f32.xlu0 %v310
  %v312 = vpop.xlane.xlu0 %311
  %v313 = vsel %vm71, %v309, -inf
  %314 = vmax.xlane.f32.xlu0 %v313
  %v315 = vpop.xlane.xlu0 %314
  %v316 = vsub.f32 %v308, %v312
  %v317 = vsub.f32 %v309, %v315
  %v318 = vmul.f32 %v316, 1.442695
  %v319 = vpow.pop %v318
  %v320 = vmul.f32 %v317, 1.442695
  %v321 = vpow.pop %v320
  %v322 = vsel %vm71, %v319, 0.0
  %323 = vadd.xlane.f32.xlu0 %v322
  %v324 = vpop.xlane.xlu0 %323
  %v325 = vsel %vm71, %v321, 0.0
  %326 = vadd.xlane.f32.xlu0 %v325
  %v327 = vpop.xlane.xlu0 %326
  %v328 = vrcp.pop %v324
  %v329 = vrcp.pop %v327
  %v330 = vmul.f32 %v319, %v328
  %v331 = vmul.f32 %v321, %v329
  %332 = vrot.lane.b32.xlu0 %v254, 64
  %v333 = vpop.permute.xlu0 %332
  %334 = vrot.lane.b32.xlu0 %v257, 64
  %v335 = vpop.permute.xlu0 %334
  %v339 = vsel %vm71, %v330, 0
  %v342 = vsel %vm71, %v331, 0
  %344 = vmatpush.msra.mxu0 0.0
  %345 = vmatpush.msra.mxu0 0.0
  %346 = vmatpush.msra.mxu0 0.0
  %347 = vmatpush.msra.mxu0 0.0
  %348 = vmatpush.msra.mxu0 0.0
  %349 = vmatpush.msra.mxu0 0.0
  %350 = vmatpush.msra.mxu0 0.0
  %351 = vmatpush.msra.mxu0 0.0
  %352 = vmatpush.msra.mxu0 0.0
  %353 = vmatpush.msra.mxu0 0.0
  %354 = vmatpush.msra.mxu0 0.0
  %355 = vmatpush.msra.mxu0 0.0
  %356 = vmatpush.msra.mxu0 0.0
  %357 = vmatpush.msra.mxu0 0.0
  %358 = vmatpush.msra.mxu0 %v335
  %359 = vmatpush.msra.mxu0 %v333
  %360 = vmatmul.f32.gmra.mxu0 %v339
  %v361 = vpop.f32.mrf.mxu0
  %v362 = vadd.f32 0.0, %v361
  %363 = vmatmul.f32.gmra.mxu0 %v342
  %v364 = vpop.f32.mrf.mxu0
  %v365 = vadd.f32 0.0, %v364
  %366 = vdwg.mxu0
  %367 = vrot.lane.b32.xlu0 %v254, 112
  %v368 = vpop.permute.xlu0 %367
  %369 = vrot.lane.b32.xlu0 %v257, 112
  %v370 = vpop.permute.xlu0 %369
  %371 = vrot.lane.b32.xlu0 %v254, 80
  %v372 = vpop.permute.xlu0 %371
  %373 = vrot.lane.b32.xlu0 %v257, 80
  %v374 = vpop.permute.xlu0 %373
  %v375 = vsel %vm71, %v368, 0
  %v377 = vsel %vm71, %v370, 0
  %v379 = vsel %vm71, %v372, 0
  %v381 = vsel %vm71, %v374, 0
  %383 = vmatpush.xpose.msra.mxu0 0.0
  %384 = vmatpush.xpose.msra.mxu0 0.0
  %385 = vmatpush.xpose.msra.mxu0 0.0
  %386 = vmatpush.xpose.msra.mxu0 0.0
  %387 = vmatpush.xpose.msra.mxu0 0.0
  %388 = vmatpush.xpose.msra.mxu0 0.0
  %389 = vmatpush.xpose.msra.mxu0 0.0
  %390 = vmatpush.xpose.msra.mxu0 0.0
  %391 = vmatpush.xpose.msra.mxu0 0.0
  %392 = vmatpush.xpose.msra.mxu0 0.0
  %393 = vmatpush.xpose.msra.mxu0 0.0
  %394 = vmatpush.xpose.msra.mxu0 0.0
  %395 = vmatpush.xpose.msra.mxu0 0.0
  %396 = vmatpush.xpose.msra.mxu0 0.0
  %397 = vmatpush.xpose.msra.mxu0 %v381
  %398 = vmatpush.xpose.msra.mxu0 %v379
  %399 = vmatmul.f32.gmra.mxu0 %v375
  %v400 = vpop.f32.mrf.mxu0
  %v401 = vadd.f32 0.0, %v400
  %402 = vmatmul.f32.gmra.mxu0 %v377
  %v403 = vpop.f32.mrf.mxu0
  %v404 = vadd.f32 0.0, %v403
  %405 = vdwg.mxu0
  %v406 = vmul.f32 %v401, 0.25
  %v407 = vmul.f32 %v404, 0.25
  %v408 = vadd.f32 %v406, %v307
  %v409 = vadd.f32 %v407, %v307
  %v410 = vsel %vm71, %v408, -inf
  %411 = vmax.xlane.f32.xlu0 %v410
  %v412 = vpop.xlane.xlu0 %411
  %v413 = vsel %vm71, %v409, -inf
  %414 = vmax.xlane.f32.xlu0 %v413
  %v415 = vpop.xlane.xlu0 %414
  %v416 = vsub.f32 %v408, %v412
  %v417 = vsub.f32 %v409, %v415
  %v418 = vmul.f32 %v416, 1.442695
  %v419 = vpow.pop %v418
  %v420 = vmul.f32 %v417, 1.442695
  %v421 = vpow.pop %v420
  %v422 = vsel %vm71, %v419, 0.0
  %423 = vadd.xlane.f32.xlu0 %v422
  %v424 = vpop.xlane.xlu0 %423
  %v425 = vsel %vm71, %v421, 0.0
  %426 = vadd.xlane.f32.xlu0 %v425
  %v427 = vpop.xlane.xlu0 %426
  %v428 = vrcp.pop %v424
  %v429 = vrcp.pop %v427
  %v430 = vmul.f32 %v419, %v428
  %v431 = vmul.f32 %v421, %v429
  %432 = vrot.lane.b32.xlu0 %v254, 48
  %v433 = vpop.permute.xlu0 %432
  %434 = vrot.lane.b32.xlu0 %v257, 48
  %v435 = vpop.permute.xlu0 %434
  %v439 = vsel %vm71, %v430, 0
  %v442 = vsel %vm71, %v431, 0
  %444 = vmatpush.msra.mxu0 0.0
  %445 = vmatpush.msra.mxu0 0.0
  %446 = vmatpush.msra.mxu0 0.0
  %447 = vmatpush.msra.mxu0 0.0
  %448 = vmatpush.msra.mxu0 0.0
  %449 = vmatpush.msra.mxu0 0.0
  %450 = vmatpush.msra.mxu0 0.0
  %451 = vmatpush.msra.mxu0 0.0
  %452 = vmatpush.msra.mxu0 0.0
  %453 = vmatpush.msra.mxu0 0.0
  %454 = vmatpush.msra.mxu0 0.0
  %455 = vmatpush.msra.mxu0 0.0
  %456 = vmatpush.msra.mxu0 0.0
  %457 = vmatpush.msra.mxu0 0.0
  %458 = vmatpush.msra.mxu0 %v435
  %459 = vmatpush.msra.mxu0 %v433
  %460 = vmatmul.f32.gmra.mxu0 %v439
  %v461 = vpop.f32.mrf.mxu0
  %v462 = vadd.f32 0.0, %v461
  %463 = vmatmul.f32.gmra.mxu0 %v442
  %v464 = vpop.f32.mrf.mxu0
  %v465 = vadd.f32 0.0, %v464
  %466 = vdwg.mxu0
  %469 = vrot.lane.b32.xlu0 %v462, 16
  %v470 = vpop.permute.xlu0 %469
  %471 = vrot.lane.b32.xlu0 %v465, 16
  %v472 = vpop.permute.xlu0 %471
  %v475 = vsel %vm71, %v362, %v470
  %v476 = vsel %vm71, %v365, %v472
  %v477 = vld [vmem:[%s2 + $0x12] sm:$0x1]
  %v478 = vsub.f32 1.0, %v477
  %v479 = vmul.f32 %v478, -1e+09
  %482 = vrot.lane.b32.xlu0 %v260, 96
  %v483 = vpop.permute.xlu0 %482
  %484 = vrot.lane.b32.xlu0 %v263, 96
  %v485 = vpop.permute.xlu0 %484
  %v486 = vsel %vm71, %v260, 0
  %v488 = vsel %vm71, %v263, 0
  %v490 = vsel %vm71, %v483, 0
  %v492 = vsel %vm71, %v485, 0
  %494 = vmatpush.xpose.msra.mxu0 0.0
  %495 = vmatpush.xpose.msra.mxu0 0.0
  %496 = vmatpush.xpose.msra.mxu0 0.0
  %497 = vmatpush.xpose.msra.mxu0 0.0
  %498 = vmatpush.xpose.msra.mxu0 0.0
  %499 = vmatpush.xpose.msra.mxu0 0.0
  %500 = vmatpush.xpose.msra.mxu0 0.0
  %501 = vmatpush.xpose.msra.mxu0 0.0
  %502 = vmatpush.xpose.msra.mxu0 0.0
  %503 = vmatpush.xpose.msra.mxu0 0.0
  %504 = vmatpush.xpose.msra.mxu0 0.0
  %505 = vmatpush.xpose.msra.mxu0 0.0
  %506 = vmatpush.xpose.msra.mxu0 0.0
  %507 = vmatpush.xpose.msra.mxu0 0.0
  %508 = vmatpush.xpose.msra.mxu0 %v492
  %509 = vmatpush.xpose.msra.mxu0 %v490
  %510 = vmatmul.f32.gmra.mxu0 %v486
  %v511 = vpop.f32.mrf.mxu0
  %v512 = vadd.f32 0.0, %v511
  %513 = vmatmul.f32.gmra.mxu0 %v488
  %v514 = vpop.f32.mrf.mxu0
  %v515 = vadd.f32 0.0, %v514
  %516 = vdwg.mxu0
  %v517 = vmul.f32 %v512, 0.25
  %v518 = vmul.f32 %v515, 0.25
  %v519 = vperm.slane %v479, 0
  %v520 = vadd.f32 %v517, %v519
  %v521 = vadd.f32 %v518, %v519
  %v522 = vsel %vm71, %v520, -inf
  %523 = vmax.xlane.f32.xlu0 %v522
  %v524 = vpop.xlane.xlu0 %523
  %v525 = vsel %vm71, %v521, -inf
  %526 = vmax.xlane.f32.xlu0 %v525
  %v527 = vpop.xlane.xlu0 %526
  %v528 = vsub.f32 %v520, %v524
  %v529 = vsub.f32 %v521, %v527
  %v530 = vmul.f32 %v528, 1.442695
  %v531 = vpow.pop %v530
  %v532 = vmul.f32 %v529, 1.442695
  %v533 = vpow.pop %v532
  %v534 = vsel %vm71, %v531, 0.0
  %535 = vadd.xlane.f32.xlu0 %v534
  %v536 = vpop.xlane.xlu0 %535
  %v537 = vsel %vm71, %v533, 0.0
  %538 = vadd.xlane.f32.xlu0 %v537
  %v539 = vpop.xlane.xlu0 %538
  %v540 = vrcp.pop %v536
  %v541 = vrcp.pop %v539
  %v542 = vmul.f32 %v531, %v540
  %v543 = vmul.f32 %v533, %v541
  %544 = vrot.lane.b32.xlu0 %v260, 64
  %v545 = vpop.permute.xlu0 %544
  %546 = vrot.lane.b32.xlu0 %v263, 64
  %v547 = vpop.permute.xlu0 %546
  %v551 = vsel %vm71, %v542, 0
  %v554 = vsel %vm71, %v543, 0
  %556 = vmatpush.msra.mxu0 0.0
  %557 = vmatpush.msra.mxu0 0.0
  %558 = vmatpush.msra.mxu0 0.0
  %559 = vmatpush.msra.mxu0 0.0
  %560 = vmatpush.msra.mxu0 0.0
  %561 = vmatpush.msra.mxu0 0.0
  %562 = vmatpush.msra.mxu0 0.0
  %563 = vmatpush.msra.mxu0 0.0
  %564 = vmatpush.msra.mxu0 0.0
  %565 = vmatpush.msra.mxu0 0.0
  %566 = vmatpush.msra.mxu0 0.0
  %567 = vmatpush.msra.mxu0 0.0
  %568 = vmatpush.msra.mxu0 0.0
  %569 = vmatpush.msra.mxu0 0.0
  %570 = vmatpush.msra.mxu0 %v547
  %571 = vmatpush.msra.mxu0 %v545
  %572 = vmatmul.f32.gmra.mxu0 %v551
  %v573 = vpop.f32.mrf.mxu0
  %v574 = vadd.f32 0.0, %v573
  %575 = vmatmul.f32.gmra.mxu0 %v554
  %v576 = vpop.f32.mrf.mxu0
  %v577 = vadd.f32 0.0, %v576
  %578 = vdwg.mxu0
  %579 = vrot.lane.b32.xlu0 %v260, 112
  %v580 = vpop.permute.xlu0 %579
  %581 = vrot.lane.b32.xlu0 %v263, 112
  %v582 = vpop.permute.xlu0 %581
  %583 = vrot.lane.b32.xlu0 %v260, 80
  %v584 = vpop.permute.xlu0 %583
  %585 = vrot.lane.b32.xlu0 %v263, 80
  %v586 = vpop.permute.xlu0 %585
  %v587 = vsel %vm71, %v580, 0
  %v589 = vsel %vm71, %v582, 0
  %v591 = vsel %vm71, %v584, 0
  %v593 = vsel %vm71, %v586, 0
  %595 = vmatpush.xpose.msra.mxu0 0.0
  %596 = vmatpush.xpose.msra.mxu0 0.0
  %597 = vmatpush.xpose.msra.mxu0 0.0
  %598 = vmatpush.xpose.msra.mxu0 0.0
  %599 = vmatpush.xpose.msra.mxu0 0.0
  %600 = vmatpush.xpose.msra.mxu0 0.0
  %601 = vmatpush.xpose.msra.mxu0 0.0
  %602 = vmatpush.xpose.msra.mxu0 0.0
  %603 = vmatpush.xpose.msra.mxu0 0.0
  %604 = vmatpush.xpose.msra.mxu0 0.0
  %605 = vmatpush.xpose.msra.mxu0 0.0
  %606 = vmatpush.xpose.msra.mxu0 0.0
  %607 = vmatpush.xpose.msra.mxu0 0.0
  %608 = vmatpush.xpose.msra.mxu0 0.0
  %609 = vmatpush.xpose.msra.mxu0 %v593
  %610 = vmatpush.xpose.msra.mxu0 %v591
  %611 = vmatmul.f32.gmra.mxu0 %v587
  %v612 = vpop.f32.mrf.mxu0
  %v613 = vadd.f32 0.0, %v612
  %614 = vmatmul.f32.gmra.mxu0 %v589
  %v615 = vpop.f32.mrf.mxu0
  %v616 = vadd.f32 0.0, %v615
  %617 = vdwg.mxu0
  %v618 = vmul.f32 %v613, 0.25
  %v619 = vmul.f32 %v616, 0.25
  %v620 = vadd.f32 %v618, %v519
  %v621 = vadd.f32 %v619, %v519
  %v622 = vsel %vm71, %v620, -inf
  %623 = vmax.xlane.f32.xlu0 %v622
  %v624 = vpop.xlane.xlu0 %623
  %v625 = vsel %vm71, %v621, -inf
  %626 = vmax.xlane.f32.xlu0 %v625
  %v627 = vpop.xlane.xlu0 %626
  %v628 = vsub.f32 %v620, %v624
  %v629 = vsub.f32 %v621, %v627
  %v630 = vmul.f32 %v628, 1.442695
  %v631 = vpow.pop %v630
  %v632 = vmul.f32 %v629, 1.442695
  %v633 = vpow.pop %v632
  %v634 = vsel %vm71, %v631, 0.0
  %635 = vadd.xlane.f32.xlu0 %v634
  %v636 = vpop.xlane.xlu0 %635
  %v637 = vsel %vm71, %v633, 0.0
  %638 = vadd.xlane.f32.xlu0 %v637
  %v639 = vpop.xlane.xlu0 %638
  %v640 = vrcp.pop %v636
  %v641 = vrcp.pop %v639
  %v642 = vmul.f32 %v631, %v640
  %v643 = vmul.f32 %v633, %v641
  %644 = vrot.lane.b32.xlu0 %v260, 48
  %v645 = vpop.permute.xlu0 %644
  %646 = vrot.lane.b32.xlu0 %v263, 48
  %v647 = vpop.permute.xlu0 %646
  %v651 = vsel %vm71, %v642, 0
  %v654 = vsel %vm71, %v643, 0
  %656 = vmatpush.msra.mxu0 0.0
  %657 = vmatpush.msra.mxu0 0.0
  %658 = vmatpush.msra.mxu0 0.0
  %659 = vmatpush.msra.mxu0 0.0
  %660 = vmatpush.msra.mxu0 0.0
  %661 = vmatpush.msra.mxu0 0.0
  %662 = vmatpush.msra.mxu0 0.0
  %663 = vmatpush.msra.mxu0 0.0
  %664 = vmatpush.msra.mxu0 0.0
  %665 = vmatpush.msra.mxu0 0.0
  %666 = vmatpush.msra.mxu0 0.0
  %667 = vmatpush.msra.mxu0 0.0
  %668 = vmatpush.msra.mxu0 0.0
  %669 = vmatpush.msra.mxu0 0.0
  %670 = vmatpush.msra.mxu0 %v647
  %671 = vmatpush.msra.mxu0 %v645
  %672 = vmatmul.f32.gmra.mxu0 %v651
  %v673 = vpop.f32.mrf.mxu0
  %v674 = vadd.f32 0.0, %v673
  %675 = vmatmul.f32.gmra.mxu0 %v654
  %v676 = vpop.f32.mrf.mxu0
  %v677 = vadd.f32 0.0, %v676
  %678 = vdwg.mxu0
  %681 = vrot.lane.b32.xlu0 %v674, 16
  %v682 = vpop.permute.xlu0 %681
  %683 = vrot.lane.b32.xlu0 %v677, 16
  %v684 = vpop.permute.xlu0 %683
  %v687 = vsel %vm71, %v574, %v682
  %v688 = vsel %vm71, %v577, %v684
  %v689 = vld [vmem:[%s6] sm:$0xff]
  %v690 = vld [vmem:[%s6 + $0x8] sm:$0xff]
  %v691 = vld [vmem:[%s6 + $0x10] sm:$0xff]
  %v692 = vld [vmem:[%s6 + $0x18] sm:$0xff]
  %v693 = vld [vmem:[%s2 + $0x7] sm:$0x1]
  %v694 = vperm.slane %v693, 0
  %v696 = vsel %vm42, %v475, 0
  %v699 = vsel %vm42, %v476, 0
  %v702 = vsel %vm42, %v687, 0
  %v705 = vsel %vm42, %v688, 0
  %707 = vmatpush.msra.mxu0 0.0
  %708 = vmatpush.msra.mxu0 0.0
  %709 = vmatpush.msra.mxu0 0.0
  %710 = vmatpush.msra.mxu0 0.0
  %711 = vmatpush.msra.mxu0 0.0
  %712 = vmatpush.msra.mxu0 0.0
  %713 = vmatpush.msra.mxu0 0.0
  %714 = vmatpush.msra.mxu0 0.0
  %715 = vmatpush.msra.mxu0 0.0
  %716 = vmatpush.msra.mxu0 0.0
  %717 = vmatpush.msra.mxu0 0.0
  %718 = vmatpush.msra.mxu0 0.0
  %719 = vmatpush.msra.mxu0 %v692
  %720 = vmatpush.msra.mxu0 %v691
  %721 = vmatpush.msra.mxu0 %v690
  %722 = vmatpush.msra.mxu0 %v689
  %723 = vmatmul.f32.gmra.mxu0 %v696
  %v724 = vpop.f32.mrf.mxu0
  %v725 = vadd.f32 %v694, %v724
  %726 = vmatmul.f32.gmra.mxu0 %v699
  %v727 = vpop.f32.mrf.mxu0
  %v728 = vadd.f32 %v694, %v727
  %729 = vmatmul.f32.gmra.mxu0 %v702
  %v730 = vpop.f32.mrf.mxu0
  %v731 = vadd.f32 %v694, %v730
  %732 = vmatmul.f32.gmra.mxu0 %v705
  %v733 = vpop.f32.mrf.mxu0
  %v734 = vadd.f32 %v694, %v733
  %735 = vdwg.mxu0
  %v736 = vadd.f32 %v214, %v725
  %v737 = vadd.f32 %v215, %v728
  %v738 = vadd.f32 %v216, %v731
  %v739 = vadd.f32 %v217, %v734
  %v740 = vld [vmem:[%s2 + $0x2] sm:$0x1]
  %v741 = vld [vmem:[%s2 + $0x3] sm:$0x1]
  %v742 = vsel %vm42, %v736, 0.0
  %743 = vadd.xlane.f32.xlu0 %v742
  %v744 = vpop.xlane.xlu0 %743
  %v745 = vsel %vm42, %v737, 0.0
  %746 = vadd.xlane.f32.xlu0 %v745
  %v747 = vpop.xlane.xlu0 %746
  %v748 = vsel %vm42, %v738, 0.0
  %749 = vadd.xlane.f32.xlu0 %v748
  %v750 = vpop.xlane.xlu0 %749
  %v751 = vsel %vm42, %v739, 0.0
  %752 = vadd.xlane.f32.xlu0 %v751
  %v753 = vpop.xlane.xlu0 %752
  %v754 = vmul.f32 %v744, %v131
  %v755 = vmul.f32 %v747, %v131
  %v756 = vmul.f32 %v750, %v131
  %v757 = vmul.f32 %v753, %v131
  %v758 = vsub.f32 %v736, %v754
  %v759 = vsub.f32 %v737, %v755
  %v760 = vsub.f32 %v738, %v756
  %v761 = vsub.f32 %v739, %v757
  %v762 = vmul.f32 %v758, %v758
  %v763 = vmul.f32 %v759, %v759
  %v764 = vmul.f32 %v760, %v760
  %v765 = vmul.f32 %v761, %v761
  %v766 = vsel %vm42, %v762, 0.0
  %767 = vadd.xlane.f32.xlu0 %v766
  %v768 = vpop.xlane.xlu0 %767
  %v769 = vsel %vm42, %v763, 0.0
  %770 = vadd.xlane.f32.xlu0 %v769
  %v771 = vpop.xlane.xlu0 %770
  %v772 = vsel %vm42, %v764, 0.0
  %773 = vadd.xlane.f32.xlu0 %v772
  %v774 = vpop.xlane.xlu0 %773
  %v775 = vsel %vm42, %v765, 0.0
  %776 = vadd.xlane.f32.xlu0 %v775
  %v777 = vpop.xlane.xlu0 %776
  %v778 = vmul.f32 %v768, %v131
  %v779 = vmul.f32 %v771, %v131
  %v780 = vmul.f32 %v774, %v131
  %v781 = vmul.f32 %v777, %v131
  %v782 = vadd.f32 %v778, 1e-12
  %v783 = vadd.f32 %v779, 1e-12
  %v784 = vadd.f32 %v780, 1e-12
  %v785 = vadd.f32 %v781, 1e-12
  %v786 = vrsqrt.pop %v782
  %v787 = vmul.f32 %v786, %v782
  %v788 = vmul.f32 %v787, %v786
  %v789 = vmul.f32 0.5, %v788
  %v790 = vsub.f32 1.5, %v789
  %v791 = vmul.f32 %v786, %v790
  %vm792 = vweird.f32 %v782
  %vm793 = vweird.f32 %v786
  %vm794 = vmor %vm792, %vm793
  %v795 = vsel %vm794, %v786, %v791
  %v796 = vrsqrt.pop %v783
  %v797 = vmul.f32 %v796, %v783
  %v798 = vmul.f32 %v797, %v796
  %v799 = vmul.f32 0.5, %v798
  %v800 = vsub.f32 1.5, %v799
  %v801 = vmul.f32 %v796, %v800
  %vm802 = vweird.f32 %v783
  %vm803 = vweird.f32 %v796
  %vm804 = vmor %vm802, %vm803
  %v805 = vsel %vm804, %v796, %v801
  %v806 = vrsqrt.pop %v784
  %v807 = vmul.f32 %v806, %v784
  %v808 = vmul.f32 %v807, %v806
  %v809 = vmul.f32 0.5, %v808
  %v810 = vsub.f32 1.5, %v809
  %v811 = vmul.f32 %v806, %v810
  %vm812 = vweird.f32 %v784
  %vm813 = vweird.f32 %v806
  %vm814 = vmor %vm812, %vm813
  %v815 = vsel %vm814, %v806, %v811
  %v816 = vrsqrt.pop %v785
  %v817 = vmul.f32 %v816, %v785
  %v818 = vmul.f32 %v817, %v816
  %v819 = vmul.f32 0.5, %v818
  %v820 = vsub.f32 1.5, %v819
  %v821 = vmul.f32 %v816, %v820
  %vm822 = vweird.f32 %v785
  %vm823 = vweird.f32 %v816
  %vm824 = vmor %vm822, %vm823
  %v825 = vsel %vm824, %v816, %v821
  %v826 = vmul.f32 %v758, %v795
  %v827 = vmul.f32 %v759, %v805
  %v828 = vmul.f32 %v760, %v815
  %v829 = vmul.f32 %v761, %v825
  %v830 = vperm.slane %v740, 0
  %v831 = vmul.f32 %v826, %v830
  %v832 = vmul.f32 %v827, %v830
  %v833 = vmul.f32 %v828, %v830
  %v834 = vmul.f32 %v829, %v830
  %v835 = vperm.slane %v741, 0
  %v836 = vadd.f32 %v831, %v835
  %v837 = vadd.f32 %v832, %v835
  %v838 = vadd.f32 %v833, %v835
  %v839 = vadd.f32 %v834, %v835
  %v840 = vld [vmem:[%s7] sm:$0xff]
  %v841 = vld [vmem:[%s7 + $0x8] sm:$0xff]
  %v842 = vld [vmem:[%s7 + $0x10] sm:$0xff]
  %v843 = vld [vmem:[%s7 + $0x18] sm:$0xff]
  %v844 = vld [vmem:[%s2 + $0x8] sm:$0x1]
  %v845 = vperm.slane %v844, 0
  %v847 = vsel %vm42, %v836, 0
  %v850 = vsel %vm42, %v837, 0
  %v853 = vsel %vm42, %v838, 0
  %v856 = vsel %vm42, %v839, 0
  %858 = vmatpush.msra.mxu0 0.0
  %859 = vmatpush.msra.mxu0 0.0
  %860 = vmatpush.msra.mxu0 0.0
  %861 = vmatpush.msra.mxu0 0.0
  %862 = vmatpush.msra.mxu0 0.0
  %863 = vmatpush.msra.mxu0 0.0
  %864 = vmatpush.msra.mxu0 0.0
  %865 = vmatpush.msra.mxu0 0.0
  %866 = vmatpush.msra.mxu0 0.0
  %867 = vmatpush.msra.mxu0 0.0
  %868 = vmatpush.msra.mxu0 0.0
  %869 = vmatpush.msra.mxu0 0.0
  %870 = vmatpush.msra.mxu0 %v843
  %871 = vmatpush.msra.mxu0 %v842
  %872 = vmatpush.msra.mxu0 %v841
  %873 = vmatpush.msra.mxu0 %v840
  %874 = vmatmul.f32.gmra.mxu0 %v847
  %v875 = vpop.f32.mrf.mxu0
  %v876 = vadd.f32 %v845, %v875
  %877 = vmatmul.f32.gmra.mxu0 %v850
  %v878 = vpop.f32.mrf.mxu0
  %v879 = vadd.f32 %v845, %v878
  %880 = vmatmul.f32.gmra.mxu0 %v853
  %v881 = vpop.f32.mrf.mxu0
  %v882 = vadd.f32 %v845, %v881
  %883 = vmatmul.f32.gmra.mxu0 %v856
  %v884 = vpop.f32.mrf.mxu0
  %v885 = vadd.f32 %v845, %v884
  %886 = vdwg.mxu0
  %v887 = vmul.f32 %v876, %v876
  %v888 = vmul.f32 %v879, %v879
  %v889 = vmul.f32 %v882, %v882
  %v890 = vmul.f32 %v885, %v885
  %v891 = vmul.f32 %v876, %v887
  %v892 = vmul.f32 %v879, %v888
  %v893 = vmul.f32 %v882, %v889
  %v894 = vmul.f32 %v885, %v890
  %v895 = vmul.f32 %v891, 0.044715
  %v896 = vmul.f32 %v892, 0.044715
  %v897 = vmul.f32 %v893, 0.044715
  %v898 = vmul.f32 %v894, 0.044715
  %v899 = vadd.f32 %v876, %v895
  %v900 = vadd.f32 %v879, %v896
  %v901 = vadd.f32 %v882, %v897
  %v902 = vadd.f32 %v885, %v898
  %v903 = vmul.f32 %v899, 0.7978846
  %v904 = vmul.f32 %v900, 0.7978846
  %v905 = vmul.f32 %v901, 0.7978846
  %v906 = vmul.f32 %v902, 0.7978846
  %v907 = vtanh.pop %v903
  %v908 = vtanh.pop %v904
  %v909 = vtanh.pop %v905
  %v910 = vtanh.pop %v906
  %v911 = vadd.f32 %v907, 1.0
  %v912 = vadd.f32 %v908, 1.0
  %v913 = vadd.f32 %v909, 1.0
  %v914 = vadd.f32 %v910, 1.0
  %v915 = vmul.f32 %v911, 0.5
  %v916 = vmul.f32 %v912, 0.5
  %v917 = vmul.f32 %v913, 0.5
  %v918 = vmul.f32 %v914, 0.5
  %v919 = vmul.f32 %v876, %v915
  %v920 = vmul.f32 %v879, %v916
  %v921 = vmul.f32 %v882, %v917
  %v922 = vmul.f32 %v885, %v918
  %v923 = vld [vmem:[%s8] sm:$0xff]
  %v924 = vld [vmem:[%s8 + $0x8] sm:$0xff]
  %v925 = vld [vmem:[%s8 + $0x10] sm:$0xff]
  %v926 = vld [vmem:[%s8 + $0x18] sm:$0xff]
  %v927 = vld [vmem:[%s8 + $0x20] sm:$0xff]
  %v928 = vld [vmem:[%s8 + $0x28] sm:$0xff]
  %v929 = vld [vmem:[%s8 + $0x30] sm:$0xff]
  %v930 = vld [vmem:[%s8 + $0x38] sm:$0xff]
  %v931 = vld [vmem:[%s8 + $0x40] sm:$0xff]
  %v932 = vld [vmem:[%s8 + $0x48] sm:$0xff]
  %v933 = vld [vmem:[%s8 + $0x50] sm:$0xff]
  %v934 = vld [vmem:[%s8 + $0x58] sm:$0xff]
  %v935 = vld [vmem:[%s8 + $0x60] sm:$0xff]
  %v936 = vld [vmem:[%s8 + $0x68] sm:$0xff]
  %v937 = vld [vmem:[%s8 + $0x70] sm:$0xff]
  %v938 = vld [vmem:[%s8 + $0x78] sm:$0xff]
  %v939 = vld [vmem:[%s2 + $0x9] sm:$0x1]
  %v940 = vperm.slane %v939, 0
  %941 = vmatpush.msra.mxu0 %v938
  %942 = vmatpush.msra.mxu0 %v937
  %943 = vmatpush.msra.mxu0 %v936
  %944 = vmatpush.msra.mxu0 %v935
  %945 = vmatpush.msra.mxu0 %v934
  %946 = vmatpush.msra.mxu0 %v933
  %947 = vmatpush.msra.mxu0 %v932
  %948 = vmatpush.msra.mxu0 %v931
  %949 = vmatpush.msra.mxu0 %v930
  %950 = vmatpush.msra.mxu0 %v929
  %951 = vmatpush.msra.mxu0 %v928
  %952 = vmatpush.msra.mxu0 %v927
  %953 = vmatpush.msra.mxu0 %v926
  %954 = vmatpush.msra.mxu0 %v925
  %955 = vmatpush.msra.mxu0 %v924
  %956 = vmatpush.msra.mxu0 %v923
  %957 = vmatmul.f32.gmra.mxu0 %v919
  %v958 = vpop.f32.mrf.mxu0
  %v959 = vadd.f32 %v940, %v958
  %960 = vmatmul.f32.gmra.mxu0 %v920
  %v961 = vpop.f32.mrf.mxu0
  %v962 = vadd.f32 %v940, %v961
  %963 = vmatmul.f32.gmra.mxu0 %v921
  %v964 = vpop.f32.mrf.mxu0
  %v965 = vadd.f32 %v940, %v964
  %966 = vmatmul.f32.gmra.mxu0 %v922
  %v967 = vpop.f32.mrf.mxu0
  %v968 = vadd.f32 %v940, %v967
  %969 = vdwg.mxu0
  %v970 = vadd.f32 %v836, %v959
  %v971 = vadd.f32 %v837, %v962
  %v972 = vadd.f32 %v838, %v965
  %v973 = vadd.f32 %v839, %v968
  %v974 = vld [vmem:[%s2 + $0x4] sm:$0x1]
  %v975 = vld [vmem:[%s2 + $0x5] sm:$0x1]
  %v976 = vsel %vm42, %v970, 0.0
  %977 = vadd.xlane.f32.xlu0 %v976
  %v978 = vpop.xlane.xlu0 %977
  %v979 = vsel %vm42, %v971, 0.0
  %980 = vadd.xlane.f32.xlu0 %v979
  %v981 = vpop.xlane.xlu0 %980
  %v982 = vsel %vm42, %v972, 0.0
  %983 = vadd.xlane.f32.xlu0 %v982
  %v984 = vpop.xlane.xlu0 %983
  %v985 = vsel %vm42, %v973, 0.0
  %986 = vadd.xlane.f32.xlu0 %v985
  %v987 = vpop.xlane.xlu0 %986
  %v988 = vmul.f32 %v978, %v131
  %v989 = vmul.f32 %v981, %v131
  %v990 = vmul.f32 %v984, %v131
  %v991 = vmul.f32 %v987, %v131
  %v992 = vsub.f32 %v970, %v988
  %v993 = vsub.f32 %v971, %v989
  %v994 = vsub.f32 %v972, %v990
  %v995 = vsub.f32 %v973, %v991
  %v996 = vmul.f32 %v992, %v992
  %v997 = vmul.f32 %v993, %v993
  %v998 = vmul.f32 %v994, %v994
  %v999 = vmul.f32 %v995, %v995
  %v1000 = vsel %vm42, %v996, 0.0
  %1001 = vadd.xlane.f32.xlu0 %v1000
  %v1002 = vpop.xlane.xlu0 %1001
  %v1003 = vsel %vm42, %v997, 0.0
  %1004 = vadd.xlane.f32.xlu0 %v1003
  %v1005 = vpop.xlane.xlu0 %1004
  %v1006 = vsel %vm42, %v998, 0.0
  %1007 = vadd.xlane.f32.xlu0 %v1006
  %v1008 = vpop.xlane.xlu0 %1007
  %v1009 = vsel %vm42, %v999, 0.0
  %1010 = vadd.xlane.f32.xlu0 %v1009
  %v1011 = vpop.xlane.xlu0 %1010
  %v1012 = vmul.f32 %v1002, %v131
  %v1013 = vmul.f32 %v1005, %v131
  %v1014 = vmul.f32 %v1008, %v131
  %v1015 = vmul.f32 %v1011, %v131
  %v1016 = vadd.f32 %v1012, 1e-12
  %v1017 = vadd.f32 %v1013, 1e-12
  %v1018 = vadd.f32 %v1014, 1e-12
  %v1019 = vadd.f32 %v1015, 1e-12
  %v1020 = vrsqrt.pop %v1016
  %v1021 = vmul.f32 %v1020, %v1016
  %v1022 = vmul.f32 %v1021, %v1020
  %v1023 = vmul.f32 0.5, %v1022
  %v1024 = vsub.f32 1.5, %v1023
  %v1025 = vmul.f32 %v1020, %v1024
  %vm1026 = vweird.f32 %v1016
  %vm1027 = vweird.f32 %v1020
  %vm1028 = vmor %vm1026, %vm1027
  %v1029 = vsel %vm1028, %v1020, %v1025
  %v1030 = vrsqrt.pop %v1017
  %v1031 = vmul.f32 %v1030, %v1017
  %v1032 = vmul.f32 %v1031, %v1030
  %v1033 = vmul.f32 0.5, %v1032
  %v1034 = vsub.f32 1.5, %v1033
  %v1035 = vmul.f32 %v1030, %v1034
  %vm1036 = vweird.f32 %v1017
  %vm1037 = vweird.f32 %v1030
  %vm1038 = vmor %vm1036, %vm1037
  %v1039 = vsel %vm1038, %v1030, %v1035
  %v1040 = vrsqrt.pop %v1018
  %v1041 = vmul.f32 %v1040, %v1018
  %v1042 = vmul.f32 %v1041, %v1040
  %v1043 = vmul.f32 0.5, %v1042
  %v1044 = vsub.f32 1.5, %v1043
  %v1045 = vmul.f32 %v1040, %v1044
  %vm1046 = vweird.f32 %v1018
  %vm1047 = vweird.f32 %v1040
  %vm1048 = vmor %vm1046, %vm1047
  %v1049 = vsel %vm1048, %v1040, %v1045
  %v1050 = vrsqrt.pop %v1019
  %v1051 = vmul.f32 %v1050, %v1019
  %v1052 = vmul.f32 %v1051, %v1050
  %v1053 = vmul.f32 0.5, %v1052
  %v1054 = vsub.f32 1.5, %v1053
  %v1055 = vmul.f32 %v1050, %v1054
  %vm1056 = vweird.f32 %v1019
  %vm1057 = vweird.f32 %v1050
  %vm1058 = vmor %vm1056, %vm1057
  %v1059 = vsel %vm1058, %v1050, %v1055
  %v1060 = vmul.f32 %v992, %v1029
  %v1061 = vmul.f32 %v993, %v1039
  %v1062 = vmul.f32 %v994, %v1049
  %v1063 = vmul.f32 %v995, %v1059
  %v1064 = vperm.slane %v974, 0
  %v1065 = vmul.f32 %v1060, %v1064
  %v1066 = vmul.f32 %v1061, %v1064
  %v1067 = vmul.f32 %v1062, %v1064
  %v1068 = vmul.f32 %v1063, %v1064
  %v1069 = vperm.slane %v975, 0
  %v1070 = vadd.f32 %v1065, %v1069
  %v1071 = vadd.f32 %v1066, %v1069
  %v1072 = vadd.f32 %v1067, %v1069
  %v1073 = vadd.f32 %v1068, %v1069
  %v1074 = vld [vmem:[%s9] sm:$0xff]
  %v1075 = vld [vmem:[%s9 + $0x8] sm:$0xff]
  %v1076 = vld [vmem:[%s9 + $0x10] sm:$0xff]
  %v1077 = vld [vmem:[%s9 + $0x18] sm:$0xff]
  %v1078 = vld [vmem:[%s2 + $0xa] sm:$0x1]
  %v1079 = vperm.slane %v1078, 0
  %v1081 = vsel %vm42, %v1070, 0
  %v1084 = vsel %vm42, %v1071, 0
  %v1087 = vsel %vm42, %v1072, 0
  %v1090 = vsel %vm42, %v1073, 0
  %1092 = vmatpush.msra.mxu0 0.0
  %1093 = vmatpush.msra.mxu0 0.0
  %1094 = vmatpush.msra.mxu0 0.0
  %1095 = vmatpush.msra.mxu0 0.0
  %1096 = vmatpush.msra.mxu0 0.0
  %1097 = vmatpush.msra.mxu0 0.0
  %1098 = vmatpush.msra.mxu0 0.0
  %1099 = vmatpush.msra.mxu0 0.0
  %1100 = vmatpush.msra.mxu0 0.0
  %1101 = vmatpush.msra.mxu0 0.0
  %1102 = vmatpush.msra.mxu0 0.0
  %1103 = vmatpush.msra.mxu0 0.0
  %1104 = vmatpush.msra.mxu0 %v1077
  %1105 = vmatpush.msra.mxu0 %v1076
  %1106 = vmatpush.msra.mxu0 %v1075
  %1107 = vmatpush.msra.mxu0 %v1074
  %1108 = vmatmul.f32.gmra.mxu0 %v1081
  %v1109 = vpop.f32.mrf.mxu0
  %v1110 = vadd.f32 %v1079, %v1109
  %1111 = vmatmul.f32.gmra.mxu0 %v1084
  %v1112 = vpop.f32.mrf.mxu0
  %v1113 = vadd.f32 %v1079, %v1112
  %1114 = vmatmul.f32.gmra.mxu0 %v1087
  %v1115 = vpop.f32.mrf.mxu0
  %v1116 = vadd.f32 %v1079, %v1115
  %1117 = vmatmul.f32.gmra.mxu0 %v1090
  %v1118 = vpop.f32.mrf.mxu0
  %v1119 = vadd.f32 %v1079, %v1118
  %1120 = vdwg.mxu0
  %1121 = vst [vmem:[%s10] sm:$0xff] %v1110
  %1122 = vst [vmem:[%s10 + $0x8] sm:$0xff] %v1113
  %1123 = vst [vmem:[%s10 + $0x10] sm:$0xff] %v1116
  %1124 = vst [vmem:[%s10 + $0x18] sm:$0xff] %v1119
  // Predicated region
  $region42: #{cross_prompt_forward.1} parent=0 // pred_check
    _
  $region43: #{cross_prompt_forward.1} parent=0 // pred_check_branch
    %1126 = sbr.rel (0) target = $region45
  $region44: #{cross_prompt_forward.1} parent=0 // pred_region
    _
  $region45: #{cross_prompt_forward.1} parent=0 // pred_fallthru
    _
  // Predicated region
  $region46: #{cross_prompt_forward.1} parent=0 // pred_check
    _
  $region47: #{cross_prompt_forward.1} parent=0 // pred_check_branch
    %1128 = sbr.rel (0) target = $region49
  $region48: #{cross_prompt_forward.1} parent=0 // pred_region
    _
  $region49: #{cross_prompt_forward.1} parent=0 // pred_fallthru
    _

</llo_original>
